<compile_context>
chip_gen: v7x
topology: tpu7x:2x2x1
jax: 0.10.0
libtpu: 0.0.40
codegen_flags: <defaults>
</compile_context>

<pallas_src>
import functools

import jax
import jax.numpy as jnp
from jax.experimental import pallas as pl
from jax.experimental.pallas import tpu as pltpu

_LANES = 128


def _round_up(x, m):
    return ((x + m - 1) // m) * m


# ------------------------------------------------------------ fused kernel --
def _fused_conv_pool_regress_kernel(x_ref, w_ref, bc_ref, wr_ref, mask_ref,
                                    br_ref, o_ref, *, k, wp, qpad):
    """One batch element per grid step.

    x_ref   : (1, Cin, Lext)    f32  halo-padded image, flat spatial axis (lane-dense)
    w_ref   : (K*K, Cout, Cin)  f32  per-tap conv weights (t = dh*K + dw)
    bc_ref  : (Cout, 1)         f32  conv bias
    wr_ref  : (Cout, 1)         f32  regressor weight
    mask_ref: (1, Qpad)         f32  validity mask, pre-scaled by 1/(H*W)
    br_ref  : (1,)              f32  regressor bias (SMEM scalar)
    o_ref   : (1, 1, 128)       f32  lane-dense per-batch output block
    """
    x = x_ref[0]                                           # (Cin, Lext) f32

    # In-kernel im2col: each conv tap is a static shifted lane-slice of the
    # padded flat image; accumulate all tap matmuls in f32.
    acc = None
    for dh in range(k):
        for dw in range(k):
            t = dh * k + dw
            s = dh * wp + dw                               # static lane offset
            xs = x[:, s:s + qpad]                          # (Cin, Qpad)
            part = jnp.dot(w_ref[t], xs,
                           preferred_element_type=jnp.float32)   # (Cout, Qpad)
            acc = part if acc is None else acc + part

    # Bias + ReLU, then masked mean over valid output positions (the mask zeroes
    # halo / lane-rounding columns and already carries the 1/(H*W) factor).
    feats = jnp.maximum(acc + bc_ref[...], 0.0)                      # (Cout, Qpad)
    pooled = jnp.sum(feats * mask_ref[...], axis=1, keepdims=True)   # (Cout, 1)

    # Regressor: tiny (Cout,1) contraction + SMEM scalar bias.
    val = jnp.sum(pooled * wr_ref[...], axis=0, keepdims=True) + br_ref[0]  # (1,1)
    o_ref[...] = jnp.broadcast_to(val.reshape(1, 1, 1), o_ref.shape)


# -------------------------------------------------------------------- glue --
def simple_regressor_forward(image_nchw, params):
    """Forward pass equivalent to SimpleRegressorModel(Backbone, LastRegressor)."""
    wc, bc, wr, br = (params["conv_w"], params["conv_b"],
                      params["lin_w"], params["lin_b"])
    B, Cin, H, W = image_nchw.shape
    Cout, _, K, _ = wc.shape
    pad = K // 2
    Hp, Wp = H + 2 * pad, W + 2 * pad

    # Lane-dense spatial extents: conv outputs are computed over the padded Hp*Wp
    # grid rounded up to a 128-lane multiple; invalid positions are masked out of
    # the pool.  Lext leaves room for the largest tap shift.
    qpad = _round_up(Hp * Wp, _LANES)
    lext = _round_up(qpad + (K - 1) * Wp + (K - 1), _LANES)

    # TODO(synk): for very large images add a spatial "arbitrary" grid axis with a
    # halo-aware manual DMA; at these sizes one full image per step fits easily.
    assert (Cin * lext + (Cout + K * K * Cin) * qpad) * 4 < 8 * 1024 * 1024

    # Halo-pad + flatten only (~1.3x at 16x16, ->1x for large images) instead of a
    # 9x im2col matrix in HBM.  All data stays f32.
    xpad = jnp.pad(image_nchw.astype(jnp.float32),
                   ((0, 0), (0, 0), (pad, pad), (pad, pad)))
    xflat = xpad.reshape(B, Cin, Hp * Wp)
    xflat = jnp.pad(xflat, ((0, 0), (0, 0), (0, lext - Hp * Wp)))

    # Per-tap conv weights: (K*K, Cout, Cin), taps ordered t = dh*K + dw.
    w_taps = jnp.transpose(wc, (2, 3, 0, 1)).reshape(K * K, Cout, Cin)
    w_taps = w_taps.astype(jnp.float32)
    bc_col = bc.reshape(Cout, 1).astype(jnp.float32)
    wr_col = wr.reshape(Cout, 1).astype(jnp.float32)
    br_vec = br.reshape(1).astype(jnp.float32)

    # Pool mask over the padded/rounded spatial axis, pre-scaled by 1/(H*W).
    q = jnp.arange(qpad)
    valid = ((q // Wp) < H) & ((q % Wp) < W)
    pool_mask = (valid.astype(jnp.float32) / float(H * W)).reshape(1, qpad)

    kernel = functools.partial(_fused_conv_pool_regress_kernel,
                               k=K, wp=Wp, qpad=qpad)

    out_pad = pl.pallas_call(
        kernel,
        out_shape=jax.ShapeDtypeStruct((B, 1, _LANES), jnp.float32),
        grid=(B,),
        in_specs=[
            pl.BlockSpec((1, Cin, lext), lambda b: (b, 0, 0)),       # image
            pl.BlockSpec((K * K, Cout, Cin), lambda b: (0, 0, 0)),   # conv taps
            pl.BlockSpec((Cout, 1), lambda b: (0, 0)),               # conv bias
            pl.BlockSpec((Cout, 1), lambda b: (0, 0)),               # regressor w
            pl.BlockSpec((1, qpad), lambda b: (0, 0)),               # pool mask
            pl.BlockSpec(memory_space=pltpu.MemorySpace.SMEM),       # regressor b
        ],
        out_specs=pl.BlockSpec((1, 1, _LANES), lambda b: (b, 0, 0)),
        compiler_params=pltpu.CompilerParams(
            # Batch is the only grid axis; "parallel" lets v7x's 2 TCs split it.
            dimension_semantics=("parallel",)),
        cost_estimate=pl.CostEstimate(
            flops=2 * B * qpad * K * K * Cin * Cout,
            transcendentals=0,
            bytes_accessed=(B * Cin * lext * 4        # f32 image (halo-padded)
                            + K * K * Cout * Cin * 4  # f32 conv weight
                            + B * _LANES * 4)),       # f32 output
    )(xflat, w_taps, bc_col, wr_col, pool_mask, br_vec)

    return out_pad[:, 0, :1]                                         # (B, 1)


# --------------------------------------------------------------- reference --
def _reference_forward(image_nchw, params):
    wc, bc, wr, br = (params["conv_w"], params["conv_b"],
                      params["lin_w"], params["lin_b"])
    feats = jax.lax.conv_general_dilated(
        image_nchw, wc, window_strides=(1, 1), padding="SAME",
        dimension_numbers=("NCHW", "OIHW", "NCHW"),
        precision=jax.lax.Precision.HIGHEST)
    feats = jnp.maximum(feats + bc.reshape(1, -1, 1, 1), 0.0)
    pooled = jnp.mean(feats, axis=(2, 3))                            # (B, Cout)
    return jnp.dot(pooled, wr,
                   precision=jax.lax.Precision.HIGHEST) + br.reshape(1, 1)


def init_params(key, cin=4, cout=32, k=3):
    k1, k2, k3, k4 = jax.random.split(key, 4)
    return {
        "conv_w": 0.1 * jax.random.normal(k1, (cout, cin, k, k), jnp.float32),
        "conv_b": 0.1 * jax.random.normal(k2, (cout,), jnp.float32),
        "lin_w": 0.1 * jax.random.normal(k3, (cout, 1), jnp.float32),
        "lin_b": 0.1 * jax.random.normal(k4, (1,), jnp.float32),
    }


if __name__ == "__main__":
    key = jax.random.PRNGKey(0)
    k_img, k_par = jax.random.split(key)

    B, C, H, W = 2, 4, 16, 16
    image = jax.random.normal(k_img, (B, C, H, W), jnp.float32)   # NCHW like PyTorch
    params = init_params(k_par, cin=C, cout=32, k=3)

    fwd = jax.jit(simple_regressor_forward)
    out = jax.block_until_ready(fwd(image, params))
    assert out.shape == (B, 1)

    ref = jax.block_until_ready(_reference_forward(image, params))
    assert jnp.allclose(out, ref, rtol=1e-3, atol=1e-3), (out, ref)

    print("KERNEL_OK")
</pallas_src>

<mosaic_0001>
module attributes {stable_mosaic.version = 11 : i64} {
  func.func @_fused_conv_pool_regress_kernel(%arg0: i32, %arg1: memref<1x4x512xf32, #tpu.memory_space<vmem>>, %arg2: memref<9x32x4xf32, #tpu.memory_space<vmem>>, %arg3: memref<32x1xf32, #tpu.memory_space<vmem>>, %arg4: memref<32x1xf32, #tpu.memory_space<vmem>>, %arg5: memref<1x384xf32, #tpu.memory_space<vmem>>, %arg6: memref<1xf32, #tpu.memory_space<smem>>, %arg7: memref<1x1x128xf32, #tpu.memory_space<vmem>>) attributes {dimension_semantics = [#tpu.dimension_semantics<parallel>], iteration_bounds = array<i64: 2>, scalar_prefetch = 0 : i64, scratch_operands = 0 : i64, tpu.core_type = #tpu.core_type<tc>, window_params = [{transform_indices = @transform_0, window_bounds = array<i64: 1, 4, 512>}, {pipeline_mode = #tpu.pipeline_mode<synchronous>, transform_indices = @transform_1, window_bounds = array<i64: 9, 32, 4>}, {pipeline_mode = #tpu.pipeline_mode<synchronous>, transform_indices = @transform_2, window_bounds = array<i64: 32, 1>}, {pipeline_mode = #tpu.pipeline_mode<synchronous>, transform_indices = @transform_3, window_bounds = array<i64: 32, 1>}, {pipeline_mode = #tpu.pipeline_mode<synchronous>, transform_indices = @transform_4, window_bounds = array<i64: 1, 384>}, {transform_indices = @transform_5, window_bounds = array<i64: 1>}, {transform_indices = @transform_6, window_bounds = array<i64: 1, 1, 128>}]} {
    %c0 = arith.constant 0 : index
    %c0_0 = arith.constant 0 : index
    %c0_1 = arith.constant 0 : index
    %0 = vector.load %arg1[%c0, %c0_0, %c0_1] : memref<1x4x512xf32, #tpu.memory_space<vmem>>, vector<1x4x512xf32>
    %1 = vector.shape_cast %0 : vector<1x4x512xf32> to vector<4x512xf32>
    %2 = vector.extract_strided_slice %1 {offsets = [0, 0], sizes = [4, 384], strides = [1, 1]} : vector<4x512xf32> to vector<4x384xf32>
    %c0_2 = arith.constant 0 : index
    %c0_3 = arith.constant 0 : index
    %c0_4 = arith.constant 0 : index
    %3 = vector.load %arg2[%c0_2, %c0_3, %c0_4] : memref<9x32x4xf32, #tpu.memory_space<vmem>>, vector<1x32x4xf32>
    %4 = vector.shape_cast %3 : vector<1x32x4xf32> to vector<32x4xf32>
    %cst = arith.constant dense<0.000000e+00> : vector<32x384xf32>
    %5 = tpu.matmul %4, %2, %cst {dimension_numbers = #tpu.dot_dimension_numbers<[1], [0], [0], [1], [0, 0, 1, 1], [], []>} : vector<32x4xf32>, vector<4x384xf32>, vector<32x384xf32> -> vector<32x384xf32>
    %6 = vector.extract_strided_slice %1 {offsets = [0, 1], sizes = [4, 384], strides = [1, 1]} : vector<4x512xf32> to vector<4x384xf32>
    %c1 = arith.constant 1 : index
    %c0_5 = arith.constant 0 : index
    %c0_6 = arith.constant 0 : index
    %7 = vector.load %arg2[%c1, %c0_5, %c0_6] : memref<9x32x4xf32, #tpu.memory_space<vmem>>, vector<1x32x4xf32>
    %8 = vector.shape_cast %7 : vector<1x32x4xf32> to vector<32x4xf32>
    %cst_7 = arith.constant dense<0.000000e+00> : vector<32x384xf32>
    %9 = tpu.matmul %8, %6, %cst_7 {dimension_numbers = #tpu.dot_dimension_numbers<[1], [0], [0], [1], [0, 0, 1, 1], [], []>} : vector<32x4xf32>, vector<4x384xf32>, vector<32x384xf32> -> vector<32x384xf32>
    %10 = arith.addf %5, %9 : vector<32x384xf32>
    %11 = vector.extract_strided_slice %1 {offsets = [0, 2], sizes = [4, 384], strides = [1, 1]} : vector<4x512xf32> to vector<4x384xf32>
    %c2 = arith.constant 2 : index
    %c0_8 = arith.constant 0 : index
    %c0_9 = arith.constant 0 : index
    %12 = vector.load %arg2[%c2, %c0_8, %c0_9] : memref<9x32x4xf32, #tpu.memory_space<vmem>>, vector<1x32x4xf32>
    %13 = vector.shape_cast %12 : vector<1x32x4xf32> to vector<32x4xf32>
    %cst_10 = arith.constant dense<0.000000e+00> : vector<32x384xf32>
    %14 = tpu.matmul %13, %11, %cst_10 {dimension_numbers = #tpu.dot_dimension_numbers<[1], [0], [0], [1], [0, 0, 1, 1], [], []>} : vector<32x4xf32>, vector<4x384xf32>, vector<32x384xf32> -> vector<32x384xf32>
    %15 = arith.addf %10, %14 : vector<32x384xf32>
    %16 = vector.extract_strided_slice %1 {offsets = [0, 18], sizes = [4, 384], strides = [1, 1]} : vector<4x512xf32> to vector<4x384xf32>
    %c3 = arith.constant 3 : index
    %c0_11 = arith.constant 0 : index
    %c0_12 = arith.constant 0 : index
    %17 = vector.load %arg2[%c3, %c0_11, %c0_12] : memref<9x32x4xf32, #tpu.memory_space<vmem>>, vector<1x32x4xf32>
    %18 = vector.shape_cast %17 : vector<1x32x4xf32> to vector<32x4xf32>
    %cst_13 = arith.constant dense<0.000000e+00> : vector<32x384xf32>
    %19 = tpu.matmul %18, %16, %cst_13 {dimension_numbers = #tpu.dot_dimension_numbers<[1], [0], [0], [1], [0, 0, 1, 1], [], []>} : vector<32x4xf32>, vector<4x384xf32>, vector<32x384xf32> -> vector<32x384xf32>
    %20 = arith.addf %15, %19 : vector<32x384xf32>
    %21 = vector.extract_strided_slice %1 {offsets = [0, 19], sizes = [4, 384], strides = [1, 1]} : vector<4x512xf32> to vector<4x384xf32>
    %c4 = arith.constant 4 : index
    %c0_14 = arith.constant 0 : index
    %c0_15 = arith.constant 0 : index
    %22 = vector.load %arg2[%c4, %c0_14, %c0_15] : memref<9x32x4xf32, #tpu.memory_space<vmem>>, vector<1x32x4xf32>
    %23 = vector.shape_cast %22 : vector<1x32x4xf32> to vector<32x4xf32>
    %cst_16 = arith.constant dense<0.000000e+00> : vector<32x384xf32>
    %24 = tpu.matmul %23, %21, %cst_16 {dimension_numbers = #tpu.dot_dimension_numbers<[1], [0], [0], [1], [0, 0, 1, 1], [], []>} : vector<32x4xf32>, vector<4x384xf32>, vector<32x384xf32> -> vector<32x384xf32>
    %25 = arith.addf %20, %24 : vector<32x384xf32>
    %26 = vector.extract_strided_slice %1 {offsets = [0, 20], sizes = [4, 384], strides = [1, 1]} : vector<4x512xf32> to vector<4x384xf32>
    %c5 = arith.constant 5 : index
    %c0_17 = arith.constant 0 : index
    %c0_18 = arith.constant 0 : index
    %27 = vector.load %arg2[%c5, %c0_17, %c0_18] : memref<9x32x4xf32, #tpu.memory_space<vmem>>, vector<1x32x4xf32>
    %28 = vector.shape_cast %27 : vector<1x32x4xf32> to vector<32x4xf32>
    %cst_19 = arith.constant dense<0.000000e+00> : vector<32x384xf32>
    %29 = tpu.matmul %28, %26, %cst_19 {dimension_numbers = #tpu.dot_dimension_numbers<[1], [0], [0], [1], [0, 0, 1, 1], [], []>} : vector<32x4xf32>, vector<4x384xf32>, vector<32x384xf32> -> vector<32x384xf32>
    %30 = arith.addf %25, %29 : vector<32x384xf32>
    %31 = vector.extract_strided_slice %1 {offsets = [0, 36], sizes = [4, 384], strides = [1, 1]} : vector<4x512xf32> to vector<4x384xf32>
    %c6 = arith.constant 6 : index
    %c0_20 = arith.constant 0 : index
    %c0_21 = arith.constant 0 : index
    %32 = vector.load %arg2[%c6, %c0_20, %c0_21] : memref<9x32x4xf32, #tpu.memory_space<vmem>>, vector<1x32x4xf32>
    %33 = vector.shape_cast %32 : vector<1x32x4xf32> to vector<32x4xf32>
    %cst_22 = arith.constant dense<0.000000e+00> : vector<32x384xf32>
    %34 = tpu.matmul %33, %31, %cst_22 {dimension_numbers = #tpu.dot_dimension_numbers<[1], [0], [0], [1], [0, 0, 1, 1], [], []>} : vector<32x4xf32>, vector<4x384xf32>, vector<32x384xf32> -> vector<32x384xf32>
    %35 = arith.addf %30, %34 : vector<32x384xf32>
    %36 = vector.extract_strided_slice %1 {offsets = [0, 37], sizes = [4, 384], strides = [1, 1]} : vector<4x512xf32> to vector<4x384xf32>
    %c7 = arith.constant 7 : index
    %c0_23 = arith.constant 0 : index
    %c0_24 = arith.constant 0 : index
    %37 = vector.load %arg2[%c7, %c0_23, %c0_24] : memref<9x32x4xf32, #tpu.memory_space<vmem>>, vector<1x32x4xf32>
    %38 = vector.shape_cast %37 : vector<1x32x4xf32> to vector<32x4xf32>
    %cst_25 = arith.constant dense<0.000000e+00> : vector<32x384xf32>
    %39 = tpu.matmul %38, %36, %cst_25 {dimension_numbers = #tpu.dot_dimension_numbers<[1], [0], [0], [1], [0, 0, 1, 1], [], []>} : vector<32x4xf32>, vector<4x384xf32>, vector<32x384xf32> -> vector<32x384xf32>
    %40 = arith.addf %35, %39 : vector<32x384xf32>
    %41 = vector.extract_strided_slice %1 {offsets = [0, 38], sizes = [4, 384], strides = [1, 1]} : vector<4x512xf32> to vector<4x384xf32>
    %c8 = arith.constant 8 : index
    %c0_26 = arith.constant 0 : index
    %c0_27 = arith.constant 0 : index
    %42 = vector.load %arg2[%c8, %c0_26, %c0_27] : memref<9x32x4xf32, #tpu.memory_space<vmem>>, vector<1x32x4xf32>
    %43 = vector.shape_cast %42 : vector<1x32x4xf32> to vector<32x4xf32>
    %cst_28 = arith.constant dense<0.000000e+00> : vector<32x384xf32>
    %44 = tpu.matmul %43, %41, %cst_28 {dimension_numbers = #tpu.dot_dimension_numbers<[1], [0], [0], [1], [0, 0, 1, 1], [], []>} : vector<32x4xf32>, vector<4x384xf32>, vector<32x384xf32> -> vector<32x384xf32>
    %45 = arith.addf %40, %44 : vector<32x384xf32>
    %c0_29 = arith.constant 0 : index
    %c0_30 = arith.constant 0 : index
    %46 = vector.load %arg3[%c0_29, %c0_30] : memref<32x1xf32, #tpu.memory_space<vmem>>, vector<32x1xf32>
    %47 = vector.broadcast %46 : vector<32x1xf32> to vector<32x384xf32>
    %48 = arith.addf %45, %47 : vector<32x384xf32>
    %cst_31 = arith.constant 0.000000e+00 : f32
    %49 = vector.broadcast %cst_31 : f32 to vector<32x384xf32>
    %50 = arith.maximumf %48, %49 : vector<32x384xf32>
    %c0_32 = arith.constant 0 : index
    %c0_33 = arith.constant 0 : index
    %51 = vector.load %arg5[%c0_32, %c0_33] : memref<1x384xf32, #tpu.memory_space<vmem>>, vector<1x384xf32>
    %52 = vector.broadcast %51 : vector<1x384xf32> to vector<32x384xf32>
    %53 = arith.mulf %50, %52 : vector<32x384xf32>
    %cst_34 = arith.constant dense<0.000000e+00> : vector<32xf32>
    %54 = vector.multi_reduction <add>, %53, %cst_34 [1] : vector<32x384xf32> to vector<32xf32>
    %55 = vector.shape_cast %54 : vector<32xf32> to vector<32x1xf32>
    %c0_35 = arith.constant 0 : index
    %c0_36 = arith.constant 0 : index
    %56 = vector.load %arg4[%c0_35, %c0_36] : memref<32x1xf32, #tpu.memory_space<vmem>>, vector<32x1xf32>
    %57 = arith.mulf %55, %56 : vector<32x1xf32>
    %cst_37 = arith.constant dense<0.000000e+00> : vector<1xf32>
    %58 = vector.multi_reduction <add>, %57, %cst_37 [0] : vector<32x1xf32> to vector<1xf32>
    %59 = vector.shape_cast %58 : vector<1xf32> to vector<1x1xf32>
    %c0_38 = arith.constant 0 : index
    %60 = memref.load %arg6[%c0_38] : memref<1xf32, #tpu.memory_space<smem>>
    %61 = vector.broadcast %60 : f32 to vector<1x1xf32>
    %62 = arith.addf %59, %61 : vector<1x1xf32>
    %63 = vector.shape_cast %62 : vector<1x1xf32> to vector<1x1x1xf32>
    %64 = vector.shape_cast %63 : vector<1x1x1xf32> to vector<1x1x1xf32>
    %65 = vector.broadcast %64 : vector<1x1x1xf32> to vector<1x1x128xf32>
    %c0_39 = arith.constant 0 : index
    %c0_40 = arith.constant 0 : index
    %c0_41 = arith.constant 0 : index
    %66 = vector.load %arg7[%c0_39, %c0_40, %c0_41] : memref<1x1x128xf32, #tpu.memory_space<vmem>>, vector<1x1x128xf32>
    tpu.vector_store %arg7[%c0_39, %c0_40, %c0_41], %65 {strides = array<i32>} : memref<1x1x128xf32, #tpu.memory_space<vmem>>, vector<1x1x128xf32>,
    return
  }
  func.func @transform_0(%arg0: i32) -> (i32, i32, i32) {
    %c0_i32 = arith.constant 0 : i32
    %c0_i32_0 = arith.constant 0 : i32
    %c0_i32_1 = arith.constant 0 : i32
    return %arg0, %c0_i32, %c0_i32_0 : i32, i32, i32
  }
  func.func @transform_1(%arg0: i32) -> (i32, i32, i32) {
    %c0_i32 = arith.constant 0 : i32
    %c0_i32_0 = arith.constant 0 : i32
    %c0_i32_1 = arith.constant 0 : i32
    %c0_i32_2 = arith.constant 0 : i32
    return %c0_i32, %c0_i32_0, %c0_i32_1 : i32, i32, i32
  }
  func.func @transform_2(%arg0: i32) -> (i32, i32) {
    %c0_i32 = arith.constant 0 : i32
    %c0_i32_0 = arith.constant 0 : i32
    %c0_i32_1 = arith.constant 0 : i32
    return %c0_i32, %c0_i32_0 : i32, i32
  }
  func.func @transform_3(%arg0: i32) -> (i32, i32) {
    %c0_i32 = arith.constant 0 : i32
    %c0_i32_0 = arith.constant 0 : i32
    %c0_i32_1 = arith.constant 0 : i32
    return %c0_i32, %c0_i32_0 : i32, i32
  }
  func.func @transform_4(%arg0: i32) -> (i32, i32) {
    %c0_i32 = arith.constant 0 : i32
    %c0_i32_0 = arith.constant 0 : i32
    %c0_i32_1 = arith.constant 0 : i32
    return %c0_i32, %c0_i32_0 : i32, i32
  }
  func.func @transform_5(%arg0: i32) -> i32 {
    %c0_i32 = arith.constant 0 : i32
    %c0_i32_0 = arith.constant 0 : i32
    return %c0_i32 : i32
  }
  func.func @transform_6(%arg0: i32) -> (i32, i32, i32) {
    %c0_i32 = arith.constant 0 : i32
    %c0_i32_0 = arith.constant 0 : i32
    %c0_i32_1 = arith.constant 0 : i32
    return %arg0, %c0_i32, %c0_i32_0 : i32, i32, i32
  }
}

</mosaic_0001>

<llo_original>
// kernel: simple_regressor_forward.1
$region0: #{simple_regressor_forward.1}
  #allocation0 [shape = 'u32[]', space=smem, size = 0x4, offset = 0x4, fixed_abs, tag = 'smem constant byte address 0x4 - core index']
  #allocation1 [shape = 'u32[144,128]{1,0:T(1,128)}', space=vmem, size = 0x12000, scoped, tag = 'internal scratch']
  #allocation2 [shape = 'f32[1]{0:T(128)S(6)}', space=smem, size = 0x200, scoped, tag = 'scoped memory for simple_regressor_forward.1']
  %s0 = inlined_call_operand.vmem [shape: f32[2,4,512], index: 0, kind: input, shape index: {}]
  %s1 = inlined_call_operand.vmem [shape: f32[9,32,4], index: 1, kind: input, shape index: {}]
  %s2 = inlined_call_operand.vmem [shape: f32[32,1], index: 2, kind: input, shape index: {}]
  %s3 = inlined_call_operand.vmem [shape: f32[32,1], index: 3, kind: input, shape index: {}]
  %s4 = inlined_call_operand.vmem [shape: f32[1,384], index: 4, kind: input, shape index: {}]
  %s5 = inlined_call_operand.<no memory space> [shape: f32[1], index: 5, kind: input, shape index: {}]
  %s6 = inlined_call_operand.vmem [shape: f32[2,1,128], index: 6, kind: output, shape index: {}]
  %s7 = sld [smem:[#allocation0]]
  $region57: #{simple_regressor_forward.1} parent=0
    _
  %s9 = ssub.s32 1, %s7
  %s10 = scalar_select 0, %s9, %s7
  %11 = sst [smem:[#allocation2]] %s5
  loop: start=0, step=1, limit=4
  $region2: #{simple_regressor_forward.1} parent=0 // loop_pre_header
    _
  $region3: #{simple_regressor_forward.1} parent=0 // loop_header
    %s13 = sphi 0, %s17
    %p14 = scmp.ge.s32.totalorder %s13, 4
    %s23 = sphi 0, %s25
    %s26 = sphi 0, %s23
    %s27 = sphi 0, %s26
    %s43 = sphi 0, %s27
    %s47 = sphi 0, %s47
    %s49 = sphi 0, %s47
    %s50 = sphi 0, %s49
    %s64 = sphi 0, %s50
    %s68 = sphi 0, %s68
    %s70 = sphi 0, %s68
    %s71 = sphi 0, %s70
    %s85 = sphi 0, %s71
    %s89 = sphi 0, %s89
    %s91 = sphi 0, %s89
    %s92 = sphi 0, %s91
    %s106 = sphi 0, %s92
    %s110 = sphi 0, %s110
    %s112 = sphi 0, %s110
    %s113 = sphi 0, %s112
    %s127 = sphi 0, %s113
    %s131 = sphi 0, %s131
    %s133 = sphi 0, %s131
    %s134 = sphi 0, %s133
    %s148 = sphi 0, %s134
    %s154 = sphi 0, %s156
    %s157 = sphi 0, %s154
    %s158 = sphi 0, %s157
    %s174 = sphi 0, %s158
  $region4: #{simple_regressor_forward.1} parent=0 // loop_header_branch
    %16 = sbr.rel (%p14) target = $region8
  $region5: #{simple_regressor_forward.1} parent=0 // loop_body
    %s18 = ssub.s32 %s13, 1
    %s19 = ssub.s32 %s13, 2
    %s20 = sadd.s32 %s13, 1
    %s21 = ssub.s32 %s13, %s20
    %p22 = scmp.eq.s32.totalorder %s21, 0
    %s24 = sadd.s32 %s23, 1
    %s25 = scalar_select %p22, %s23, %s24
    %p28 = pneg %p22
    %p29 = scmp.eq.s32.totalorder %s13, 1
    %p30 = por %p28, %p29
    %p31 = scmp.ne.s32.totalorder %s23, %s26
    %p32 = scmp.eq.s32.totalorder %s13, 0
    %p33 = por %p31, %p32
    %p34 = scmp.ne.s32.totalorder %s23, %s26
    %p35 = scmp.eq.s32.totalorder %s18, 1
    %p36 = por %p34, %p35
    %p37 = scmp.ne.s32.totalorder %s26, %s27
    %p38 = scmp.eq.s32.totalorder %s18, 0
    %p39 = por %p37, %p38
    %p40 = scmp.ne.s32.totalorder %s26, %s27
    %p41 = scmp.eq.s32.totalorder %s19, 1
    %p42 = por %p40, %p41
    %p44 = scmp.ne.s32.totalorder %s27, %s43
    %p45 = scmp.eq.s32.totalorder %s19, 0
    %p46 = por %p44, %p45
    %s48 = sadd.s32 %s47, 1
    %p51 = scmp.eq.s32.totalorder %s13, 1
    %p52 = scmp.ne.s32.totalorder %s47, %s49
    %p53 = scmp.eq.s32.totalorder %s13, 0
    %p54 = por %p52, %p53
    %p55 = scmp.ne.s32.totalorder %s47, %s49
    %p56 = scmp.eq.s32.totalorder %s18, 1
    %p57 = por %p55, %p56
    %p58 = scmp.ne.s32.totalorder %s49, %s50
    %p59 = scmp.eq.s32.totalorder %s18, 0
    %p60 = por %p58, %p59
    %p61 = scmp.ne.s32.totalorder %s49, %s50
    %p62 = scmp.eq.s32.totalorder %s19, 1
    %p63 = por %p61, %p62
    %p65 = scmp.ne.s32.totalorder %s50, %s64
    %p66 = scmp.eq.s32.totalorder %s19, 0
    %p67 = por %p65, %p66
    %s69 = sadd.s32 %s68, 1
    %p72 = scmp.eq.s32.totalorder %s13, 1
    %p73 = scmp.ne.s32.totalorder %s68, %s70
    %p74 = scmp.eq.s32.totalorder %s13, 0
    %p75 = por %p73, %p74
    %p76 = scmp.ne.s32.totalorder %s68, %s70
    %p77 = scmp.eq.s32.totalorder %s18, 1
    %p78 = por %p76, %p77
    %p79 = scmp.ne.s32.totalorder %s70, %s71
    %p80 = scmp.eq.s32.totalorder %s18, 0
    %p81 = por %p79, %p80
    %p82 = scmp.ne.s32.totalorder %s70, %s71
    %p83 = scmp.eq.s32.totalorder %s19, 1
    %p84 = por %p82, %p83
    %p86 = scmp.ne.s32.totalorder %s71, %s85
    %p87 = scmp.eq.s32.totalorder %s19, 0
    %p88 = por %p86, %p87
    %s90 = sadd.s32 %s89, 1
    %p93 = scmp.eq.s32.totalorder %s13, 1
    %p94 = scmp.ne.s32.totalorder %s89, %s91
    %p95 = scmp.eq.s32.totalorder %s13, 0
    %p96 = por %p94, %p95
    %p97 = scmp.ne.s32.totalorder %s89, %s91
    %p98 = scmp.eq.s32.totalorder %s18, 1
    %p99 = por %p97, %p98
    %p100 = scmp.ne.s32.totalorder %s91, %s92
    %p101 = scmp.eq.s32.totalorder %s18, 0
    %p102 = por %p100, %p101
    %p103 = scmp.ne.s32.totalorder %s91, %s92
    %p104 = scmp.eq.s32.totalorder %s19, 1
    %p105 = por %p103, %p104
    %p107 = scmp.ne.s32.totalorder %s92, %s106
    %p108 = scmp.eq.s32.totalorder %s19, 0
    %p109 = por %p107, %p108
    %s111 = sadd.s32 %s110, 1
    %p114 = scmp.eq.s32.totalorder %s13, 1
    %p115 = scmp.ne.s32.totalorder %s110, %s112
    %p116 = scmp.eq.s32.totalorder %s13, 0
    %p117 = por %p115, %p116
    %p118 = scmp.ne.s32.totalorder %s110, %s112
    %p119 = scmp.eq.s32.totalorder %s18, 1
    %p120 = por %p118, %p119
    %p121 = scmp.ne.s32.totalorder %s112, %s113
    %p122 = scmp.eq.s32.totalorder %s18, 0
    %p123 = por %p121, %p122
    %p124 = scmp.ne.s32.totalorder %s112, %s113
    %p125 = scmp.eq.s32.totalorder %s19, 1
    %p126 = por %p124, %p125
    %p128 = scmp.ne.s32.totalorder %s113, %s127
    %p129 = scmp.eq.s32.totalorder %s19, 0
    %p130 = por %p128, %p129
    %s132 = sadd.s32 %s131, 1
    %p135 = scmp.eq.s32.totalorder %s13, 1
    %p136 = scmp.ne.s32.totalorder %s131, %s133
    %p137 = scmp.eq.s32.totalorder %s13, 0
    %p138 = por %p136, %p137
    %p139 = scmp.ne.s32.totalorder %s131, %s133
    %p140 = scmp.eq.s32.totalorder %s18, 1
    %p141 = por %p139, %p140
    %p142 = scmp.ne.s32.totalorder %s133, %s134
    %p143 = scmp.eq.s32.totalorder %s18, 0
    %p144 = por %p142, %p143
    %p145 = scmp.ne.s32.totalorder %s133, %s134
    %p146 = scmp.eq.s32.totalorder %s19, 1
    %p147 = por %p145, %p146
    %p149 = scmp.ne.s32.totalorder %s134, %s148
    %p150 = scmp.eq.s32.totalorder %s19, 0
    %p151 = por %p149, %p150
    %s152 = ssub.s32 %s13, %s20
    %p153 = scmp.eq.s32.totalorder %s152, 0
    %s155 = sadd.s32 %s154, 1
    %s156 = scalar_select %p153, %s154, %s155
    %p159 = pneg %p153
    %p160 = scmp.eq.s32.totalorder %s13, 1
    %p161 = por %p159, %p160
    %p162 = scmp.ne.s32.totalorder %s154, %s157
    %p163 = scmp.eq.s32.totalorder %s13, 0
    %p164 = por %p162, %p163
    %p165 = scmp.ne.s32.totalorder %s154, %s157
    %p166 = scmp.eq.s32.totalorder %s18, 1
    %p167 = por %p165, %p166
    %p168 = scmp.ne.s32.totalorder %s157, %s158
    %p169 = scmp.eq.s32.totalorder %s18, 0
    %p170 = por %p168, %p169
    %p171 = scmp.ne.s32.totalorder %s157, %s158
    %p172 = scmp.eq.s32.totalorder %s19, 1
    %p173 = por %p171, %p172
    %p175 = scmp.ne.s32.totalorder %s158, %s174
    %p176 = scmp.eq.s32.totalorder %s19, 0
    %p177 = por %p175, %p176
    %p178 = scmp.le.s32.totalorder 1, %s13
    %p179 = scmp.lt.s32.totalorder %s13, 3
    %p180 = pnand %p178, %p179
    %p181 = pneg %p180
    // Predicated region
    $region9: #{simple_regressor_forward.1} parent=5 // pred_check
      _
    $region10: #{simple_regressor_forward.1} parent=5 // pred_check_branch
      %183 = sbr.rel (%p180) target = $region12
    $region11: #{simple_regressor_forward.1} parent=5 // pred_region
      %s184 = ssub.s32 %s13, 1
      // Predicated region
      $region13: #{simple_regressor_forward.1} parent=11 // pred_check
        %p185 = pneg %p60
      $region14: #{simple_regressor_forward.1} parent=11 // pred_check_branch
        %187 = sbr.rel (%p185) target = $region16
      $region15: #{simple_regressor_forward.1} parent=11 // pred_region
        _
      $region16: #{simple_regressor_forward.1} parent=11 // pred_fallthru
        _
      // Predicated region
      $region17: #{simple_regressor_forward.1} parent=11 // pred_check
        %p188 = pneg %p81
      $region18: #{simple_regressor_forward.1} parent=11 // pred_check_branch
        %190 = sbr.rel (%p188) target = $region20
      $region19: #{simple_regressor_forward.1} parent=11 // pred_region
        _
      $region20: #{simple_regressor_forward.1} parent=11 // pred_fallthru
        _
      // Predicated region
      $region21: #{simple_regressor_forward.1} parent=11 // pred_check
        %p191 = pneg %p102
      $region22: #{simple_regressor_forward.1} parent=11 // pred_check_branch
        %193 = sbr.rel (%p191) target = $region24
      $region23: #{simple_regressor_forward.1} parent=11 // pred_region
        _
      $region24: #{simple_regressor_forward.1} parent=11 // pred_fallthru
        _
      // Predicated region
      $region25: #{simple_regressor_forward.1} parent=11 // pred_check
        %p194 = pneg %p123
      $region26: #{simple_regressor_forward.1} parent=11 // pred_check_branch
        %196 = sbr.rel (%p194) target = $region28
      $region27: #{simple_regressor_forward.1} parent=11 // pred_region
        _
      $region28: #{simple_regressor_forward.1} parent=11 // pred_fallthru
        _
      // Predicated region
      $region29: #{simple_regressor_forward.1} parent=11 // pred_check
        %p197 = pneg %p144
      $region30: #{simple_regressor_forward.1} parent=11 // pred_check_branch
        %199 = sbr.rel (%p197) target = $region32
      $region31: #{simple_regressor_forward.1} parent=11 // pred_region
        _
      $region32: #{simple_regressor_forward.1} parent=11 // pred_fallthru
        _
    $region12: #{simple_regressor_forward.1} parent=5 // pred_fallthru
      _
    %p200 = scmp.lt.s32.totalorder %s13, 2
    // Predicated region
    $region33: #{simple_regressor_forward.1} parent=5 // pred_check
      %p201 = pneg %p200
    $region34: #{simple_regressor_forward.1} parent=5 // pred_check_branch
      %203 = sbr.rel (%p201) target = $region36
    $region35: #{simple_regressor_forward.1} parent=5 // pred_region
      // Predicated region
      $region37: #{simple_regressor_forward.1} parent=35 // pred_check
        %p204 = pneg %p33
      $region38: #{simple_regressor_forward.1} parent=35 // pred_check_branch
        %206 = sbr.rel (%p204) target = $region40
      $region39: #{simple_regressor_forward.1} parent=35 // pred_region
        %p207 = scmp.lt.s32.totalorder %s13, 1
        %s208 = scalar_select %p207, %s13, 1
        %s209 = smul.addr %s208, 4
        %s210 = smul.addr %s209, 4
        %s211 = scalar_lea.vmem %s0, %s210
      $region40: #{simple_regressor_forward.1} parent=35 // pred_fallthru
        _
    $region36: #{simple_regressor_forward.1} parent=5 // pred_fallthru
      _
    %p212 = scmp.le.s32.totalorder 1, %s13
    %p213 = scmp.lt.s32.totalorder %s13, 3
    %p214 = pnand %p212, %p213
    %p215 = pneg %p214
    // Predicated region
    $region41: #{simple_regressor_forward.1} parent=5 // pred_check
      _
    $region42: #{simple_regressor_forward.1} parent=5 // pred_check_branch
      %217 = sbr.rel (%p214) target = $region44
    $region43: #{simple_regressor_forward.1} parent=5 // pred_region
      %s218 = ssub.s32 %s13, 1
      %p219 = scmp.lt.s32.totalorder %s18, 1
      %s220 = scalar_select %p219, %s18, 1
      %s221 = smul.addr %s220, 4
      %s222 = smul.addr %s221, 4
      %s223 = scalar_lea.vmem %s0, %s222
      %p224 = pneg %p39
      %p225 = pneg %p36
      %p226 = pneg %p60
      %p227 = pneg %p57
      %p228 = pneg %p81
      %p229 = pneg %p78
      %p230 = pneg %p102
      %p231 = pneg %p99
      %p232 = pneg %p123
      %p233 = pneg %p120
      %p234 = pneg %p144
      %p235 = pneg %p141
      %p236 = pneg %p170
      %p237 = pneg %p167
      %p238 = scmp.lt.s32.totalorder %s18, 1
      %s239 = scalar_select %p238, %s18, 1
      %s240 = scalar_lea.vmem %s6, %s239
      %p241 = scmp.lt.s32.totalorder %s18, 1
      %s242 = scalar_select %p241, %s18, 1
      %s243 = smul.addr %s242, 4
      %s244 = smul.addr %s243, 4
      %s245 = scalar_lea.vmem %s0, %s244
      %p246 = scmp.lt.s32.totalorder %s18, 1
      %s247 = scalar_select %p246, %s18, 1
      %s248 = scalar_lea.vmem %s6, %s247
      %v249 = vld [vmem:[%s245] sm:$0xff]
      %v250 = vld [vmem:[%s245 + $0x8] sm:$0xff]
      %v251 = vld [vmem:[%s1] sm:$0xff]
      %v252 = vld [vmem:[%s1 + $0x8] sm:$0xff]
      %v253 = vld [vmem:[%s1 + $0x10] sm:$0xff]
      %v254 = vld [vmem:[%s1 + $0x18] sm:$0xff]
      %s255 = scalar_lea.vmem %s1, 32
      %v256 = vld [vmem:[%s255] sm:$0xff]
      %v257 = vld [vmem:[%s255 + $0x8] sm:$0xff]
      %v258 = vld [vmem:[%s255 + $0x10] sm:$0xff]
      %v259 = vld [vmem:[%s255 + $0x18] sm:$0xff]
      %v262 = vcombine.high %v249, %v249
      %v263 = vcombine.high %v250, %v250
      %264 = vrot.lane.b32.xlu0 %v249, 127
      %v265 = vpop.permute.xlu0 %264
      %266 = vrot.lane.b32.xlu0 %v262, 127
      %v267 = vpop.permute.xlu0 %266
      %268 = vrot.lane.b32.xlu0 %v250, 127
      %v269 = vpop.permute.xlu0 %268
      %270 = vrot.lane.b32.xlu0 %v263, 127
      %v271 = vpop.permute.xlu0 %270
      %vm272 = vcmask 1039360
      %v273 = vsel %vm272, %v265, %v267
      %v274 = vsel %vm272, %v267, %v269
      %v275 = vsel %vm272, %v269, %v271
      %vm276 = vcmask 31744
      %v278 = vsel %vm276, %v256, 0
      %v281 = vsel %vm276, %v257, 0
      %v284 = vsel %vm276, %v258, 0
      %v287 = vsel %vm276, %v259, 0
      %vm289 = vcmask 1043456
      %v290 = vsel %vm289, %v273, 0
      %v292 = vsel %vm289, %v274, 0
      %v294 = vsel %vm289, %v275, 0
      %296 = vmatprep.subr.mxu0 %v292
      %297 = vmatpush1.msra.mxu0 %v290
      %298 = vmatprep.subr.mxu0 0.0
      %299 = vmatpush1.msra.mxu0 0.0
      %300 = vmatprep.subr.mxu0 0.0
      %301 = vmatpush1.msra.mxu0 0.0
      %302 = vmatprep.subr.mxu0 0.0
      %303 = vmatpush1.msra.mxu0 0.0
      %304 = vmatprep.subr.mxu0 0.0
      %305 = vmatpush1.msra.mxu0 0.0
      %306 = vmatprep.subr.mxu0 0.0
      %307 = vmatpush1.msra.mxu0 0.0
      %308 = vmatprep.subr.mxu0 0.0
      %309 = vmatpush1.msra.mxu0 0.0
      %310 = vmatprep.subr.mxu0 0.0
      %311 = vmatpush1.msra.mxu0 0.0
      %312 = vmatprep.subr.mxu0 0.0
      %313 = vmatpush1.msra.mxu0 0.0
      %314 = vmatprep.subr.mxu0 0.0
      %315 = vmatpush1.msra.mxu0 0.0
      %316 = vmatprep.subr.mxu0 0.0
      %317 = vmatpush1.msra.mxu0 0.0
      %318 = vmatprep.subr.mxu0 0.0
      %319 = vmatpush1.msra.mxu0 0.0
      %320 = vmatprep.subr.mxu0 0.0
      %321 = vmatpush1.msra.mxu0 0.0
      %322 = vmatprep.subr.mxu0 0.0
      %323 = vmatpush1.msra.mxu0 0.0
      %324 = vmatprep.subr.mxu0 0.0
      %325 = vmatpush1.msra.mxu0 0.0
      %326 = vmatprep.subr.mxu0 0.0
      %327 = vmatpush1.msra.mxu0 0.0
      %328 = vmatprep.subr.mxu0 0.0
      %329 = vmatpush1.msra.mxu0 0.0
      %330 = vmatprep.subr.mxu0 0.0
      %331 = vmatpush1.msra.mxu0 0.0
      %332 = vmatprep.subr.mxu0 0.0
      %333 = vmatpush1.msra.mxu0 0.0
      %334 = vmatprep.subr.mxu0 0.0
      %335 = vmatpush1.msra.mxu0 0.0
      %336 = vmatprep.subr.mxu0 0.0
      %337 = vmatpush1.msra.mxu0 0.0
      %338 = vmatprep.subr.mxu0 0.0
      %339 = vmatpush1.msra.mxu0 0.0
      %340 = vmatprep.subr.mxu0 0.0
      %341 = vmatpush1.msra.mxu0 0.0
      %342 = vmatprep.subr.mxu0 0.0
      %343 = vmatpush1.msra.mxu0 0.0
      %344 = vmatprep.subr.mxu0 0.0
      %345 = vmatpush1.msra.mxu0 0.0
      %346 = vmatprep.subr.mxu0 0.0
      %347 = vmatpush1.msra.mxu0 0.0
      %348 = vmatprep.subr.mxu0 0.0
      %349 = vmatpush1.msra.mxu0 0.0
      %350 = vmatprep.subr.mxu0 0.0
      %351 = vmatpush1.msra.mxu0 0.0
      %352 = vmatprep.subr.mxu0 0.0
      %353 = vmatpush1.msra.mxu0 0.0
      %354 = vmatprep.subr.mxu0 0.0
      %355 = vmatpush1.msra.mxu0 0.0
      %356 = vmatprep.subr.mxu0 0.0
      %357 = vmatpush1.msra.mxu0 0.0
      %358 = vmatprep.subr.mxu0 0.0
      %359 = vmatpush1.msra.mxu0 0.0
      %360 = vmatprep.mubr.f32.mxu0 0.0
      %361 = vmatmul.mubr.f32.gmra.mrb[0].mxu0 %v278
      %v362 = vpop.f32.mrb[0].mxu0
      %v363 = vadd.f32 0.0, %v362
      %v364 = vpop.f32.mrb[0].mxu0
      %v365 = vadd.f32 0.0, %v364
      %366 = vmatprep.mubr.f32.mxu0 0.0
      %367 = vmatmul.mubr.f32.gmra.mrb[0].mxu0 %v281
      %v368 = vpop.f32.mrb[0].mxu0
      %v369 = vadd.f32 0.0, %v368
      %v370 = vpop.f32.mrb[0].mxu0
      %v371 = vadd.f32 0.0, %v370
      %372 = vmatprep.mubr.f32.mxu0 0.0
      %373 = vmatmul.mubr.f32.gmra.mrb[0].mxu0 %v284
      %v374 = vpop.f32.mrb[0].mxu0
      %v375 = vadd.f32 0.0, %v374
      %v376 = vpop.f32.mrb[0].mxu0
      %v377 = vadd.f32 0.0, %v376
      %378 = vmatprep.mubr.f32.mxu0 0.0
      %379 = vmatmul.mubr.f32.gmra.mrb[0].mxu0 %v287
      %v380 = vpop.f32.mrb[0].mxu0
      %v381 = vadd.f32 0.0, %v380
      %v382 = vpop.f32.mrb[0].mxu0
      %v383 = vadd.f32 0.0, %v382
      %384 = vdwg.mxu0
      %385 = vmatprep.subr.mxu0 0.0
      %386 = vmatpush1.msra.mxu0 %v294
      %387 = vmatprep.subr.mxu0 0.0
      %388 = vmatpush1.msra.mxu0 0.0
      %389 = vmatprep.subr.mxu0 0.0
      %390 = vmatpush1.msra.mxu0 0.0
      %391 = vmatprep.subr.mxu0 0.0
      %392 = vmatpush1.msra.mxu0 0.0
      %393 = vmatprep.subr.mxu0 0.0
      %394 = vmatpush1.msra.mxu0 0.0
      %395 = vmatprep.subr.mxu0 0.0
      %396 = vmatpush1.msra.mxu0 0.0
      %397 = vmatprep.subr.mxu0 0.0
      %398 = vmatpush1.msra.mxu0 0.0
      %399 = vmatprep.subr.mxu0 0.0
      %400 = vmatpush1.msra.mxu0 0.0
      %401 = vmatprep.subr.mxu0 0.0
      %402 = vmatpush1.msra.mxu0 0.0
      %403 = vmatprep.subr.mxu0 0.0
      %404 = vmatpush1.msra.mxu0 0.0
      %405 = vmatprep.subr.mxu0 0.0
      %406 = vmatpush1.msra.mxu0 0.0
      %407 = vmatprep.subr.mxu0 0.0
      %408 = vmatpush1.msra.mxu0 0.0
      %409 = vmatprep.subr.mxu0 0.0
      %410 = vmatpush1.msra.mxu0 0.0
      %411 = vmatprep.subr.mxu0 0.0
      %412 = vmatpush1.msra.mxu0 0.0
      %413 = vmatprep.subr.mxu0 0.0
      %414 = vmatpush1.msra.mxu0 0.0
      %415 = vmatprep.subr.mxu0 0.0
      %416 = vmatpush1.msra.mxu0 0.0
      %417 = vmatprep.subr.mxu0 0.0
      %418 = vmatpush1.msra.mxu0 0.0
      %419 = vmatprep.subr.mxu0 0.0
      %420 = vmatpush1.msra.mxu0 0.0
      %421 = vmatprep.subr.mxu0 0.0
      %422 = vmatpush1.msra.mxu0 0.0
      %423 = vmatprep.subr.mxu0 0.0
      %424 = vmatpush1.msra.mxu0 0.0
      %425 = vmatprep.subr.mxu0 0.0
      %426 = vmatpush1.msra.mxu0 0.0
      %427 = vmatprep.subr.mxu0 0.0
      %428 = vmatpush1.msra.mxu0 0.0
      %429 = vmatprep.subr.mxu0 0.0
      %430 = vmatpush1.msra.mxu0 0.0
      %431 = vmatprep.subr.mxu0 0.0
      %432 = vmatpush1.msra.mxu0 0.0
      %433 = vmatprep.subr.mxu0 0.0
      %434 = vmatpush1.msra.mxu0 0.0
      %435 = vmatprep.subr.mxu0 0.0
      %436 = vmatpush1.msra.mxu0 0.0
      %437 = vmatprep.subr.mxu0 0.0
      %438 = vmatpush1.msra.mxu0 0.0
      %439 = vmatprep.subr.mxu0 0.0
      %440 = vmatpush1.msra.mxu0 0.0
      %441 = vmatprep.subr.mxu0 0.0
      %442 = vmatpush1.msra.mxu0 0.0
      %443 = vmatprep.subr.mxu0 0.0
      %444 = vmatpush1.msra.mxu0 0.0
      %445 = vmatprep.subr.mxu0 0.0
      %446 = vmatpush1.msra.mxu0 0.0
      %447 = vmatprep.subr.mxu0 0.0
      %448 = vmatpush1.msra.mxu0 0.0
      %449 = vmatprep.mubr.f32.mxu0 0.0
      %450 = vmatmul.mubr.f32.gmra.mrb[0].mxu0 %v278
      %v451 = vpop.f32.mrb[0].mxu0
      %v452 = vadd.f32 0.0, %v451
      %v453 = vpop.f32.mrb[0].mxu0
      %454 = vmatprep.mubr.f32.mxu0 0.0
      %455 = vmatmul.mubr.f32.gmra.mrb[0].mxu0 %v281
      %v456 = vpop.f32.mrb[0].mxu0
      %v457 = vadd.f32 0.0, %v456
      %v458 = vpop.f32.mrb[0].mxu0
      %459 = vmatprep.mubr.f32.mxu0 0.0
      %460 = vmatmul.mubr.f32.gmra.mrb[0].mxu0 %v284
      %v461 = vpop.f32.mrb[0].mxu0
      %v462 = vadd.f32 0.0, %v461
      %v463 = vpop.f32.mrb[0].mxu0
      %464 = vmatprep.mubr.f32.mxu0 0.0
      %465 = vmatmul.mubr.f32.gmra.mrb[0].mxu0 %v287
      %v466 = vpop.f32.mrb[0].mxu0
      %v467 = vadd.f32 0.0, %v466
      %v468 = vpop.f32.mrb[0].mxu0
      %469 = vdwg.mxu0
      %v471 = vsel %vm276, %v251, 0
      %v474 = vsel %vm276, %v252, 0
      %v477 = vsel %vm276, %v253, 0
      %v480 = vsel %vm276, %v254, 0
      %v482 = vsel %vm289, %v249, 0
      %v484 = vsel %vm289, %v262, 0
      %v486 = vsel %vm289, %v250, 0
      %488 = vmatprep.subr.mxu0 %v484
      %489 = vmatpush1.msra.mxu0 %v482
      %490 = vmatprep.subr.mxu0 0.0
      %491 = vmatpush1.msra.mxu0 0.0
      %492 = vmatprep.subr.mxu0 0.0
      %493 = vmatpush1.msra.mxu0 0.0
      %494 = vmatprep.subr.mxu0 0.0
      %495 = vmatpush1.msra.mxu0 0.0
      %496 = vmatprep.subr.mxu0 0.0
      %497 = vmatpush1.msra.mxu0 0.0
      %498 = vmatprep.subr.mxu0 0.0
      %499 = vmatpush1.msra.mxu0 0.0
      %500 = vmatprep.subr.mxu0 0.0
      %501 = vmatpush1.msra.mxu0 0.0
      %502 = vmatprep.subr.mxu0 0.0
      %503 = vmatpush1.msra.mxu0 0.0
      %504 = vmatprep.subr.mxu0 0.0
      %505 = vmatpush1.msra.mxu0 0.0
      %506 = vmatprep.subr.mxu0 0.0
      %507 = vmatpush1.msra.mxu0 0.0
      %508 = vmatprep.subr.mxu0 0.0
      %509 = vmatpush1.msra.mxu0 0.0
      %510 = vmatprep.subr.mxu0 0.0
      %511 = vmatpush1.msra.mxu0 0.0
      %512 = vmatprep.subr.mxu0 0.0
      %513 = vmatpush1.msra.mxu0 0.0
      %514 = vmatprep.subr.mxu0 0.0
      %515 = vmatpush1.msra.mxu0 0.0
      %516 = vmatprep.subr.mxu0 0.0
      %517 = vmatpush1.msra.mxu0 0.0
      %518 = vmatprep.subr.mxu0 0.0
      %519 = vmatpush1.msra.mxu0 0.0
      %520 = vmatprep.subr.mxu0 0.0
      %521 = vmatpush1.msra.mxu0 0.0
      %522 = vmatprep.subr.mxu0 0.0
      %523 = vmatpush1.msra.mxu0 0.0
      %524 = vmatprep.subr.mxu0 0.0
      %525 = vmatpush1.msra.mxu0 0.0
      %526 = vmatprep.subr.mxu0 0.0
      %527 = vmatpush1.msra.mxu0 0.0
      %528 = vmatprep.subr.mxu0 0.0
      %529 = vmatpush1.msra.mxu0 0.0
      %530 = vmatprep.subr.mxu0 0.0
      %531 = vmatpush1.msra.mxu0 0.0
      %532 = vmatprep.subr.mxu0 0.0
      %533 = vmatpush1.msra.mxu0 0.0
      %534 = vmatprep.subr.mxu0 0.0
      %535 = vmatpush1.msra.mxu0 0.0
      %536 = vmatprep.subr.mxu0 0.0
      %537 = vmatpush1.msra.mxu0 0.0
      %538 = vmatprep.subr.mxu0 0.0
      %539 = vmatpush1.msra.mxu0 0.0
      %540 = vmatprep.subr.mxu0 0.0
      %541 = vmatpush1.msra.mxu0 0.0
      %542 = vmatprep.subr.mxu0 0.0
      %543 = vmatpush1.msra.mxu0 0.0
      %544 = vmatprep.subr.mxu0 0.0
      %545 = vmatpush1.msra.mxu0 0.0
      %546 = vmatprep.subr.mxu0 0.0
      %547 = vmatpush1.msra.mxu0 0.0
      %548 = vmatprep.subr.mxu0 0.0
      %549 = vmatpush1.msra.mxu0 0.0
      %550 = vmatprep.subr.mxu0 0.0
      %551 = vmatpush1.msra.mxu0 0.0
      %552 = vmatprep.mubr.f32.mxu0 0.0
      %553 = vmatmul.mubr.f32.gmra.mrb[0].mxu0 %v471
      %v554 = vpop.f32.mrb[0].mxu0
      %v555 = vadd.f32 %v363, %v554
      %v556 = vpop.f32.mrb[0].mxu0
      %v557 = vadd.f32 %v365, %v556
      %558 = vmatprep.mubr.f32.mxu0 0.0
      %559 = vmatmul.mubr.f32.gmra.mrb[0].mxu0 %v474
      %v560 = vpop.f32.mrb[0].mxu0
      %v561 = vadd.f32 %v369, %v560
      %v562 = vpop.f32.mrb[0].mxu0
      %v563 = vadd.f32 %v371, %v562
      %564 = vmatprep.mubr.f32.mxu0 0.0
      %565 = vmatmul.mubr.f32.gmra.mrb[0].mxu0 %v477
      %v566 = vpop.f32.mrb[0].mxu0
      %v567 = vadd.f32 %v375, %v566
      %v568 = vpop.f32.mrb[0].mxu0
      %v569 = vadd.f32 %v377, %v568
      %570 = vmatprep.mubr.f32.mxu0 0.0
      %571 = vmatmul.mubr.f32.gmra.mrb[0].mxu0 %v480
      %v572 = vpop.f32.mrb[0].mxu0
      %v573 = vadd.f32 %v381, %v572
      %v574 = vpop.f32.mrb[0].mxu0
      %v575 = vadd.f32 %v383, %v574
      %576 = vdwg.mxu0
      %577 = vmatprep.subr.mxu0 0.0
      %578 = vmatpush1.msra.mxu0 %v486
      %579 = vmatprep.subr.mxu0 0.0
      %580 = vmatpush1.msra.mxu0 0.0
      %581 = vmatprep.subr.mxu0 0.0
      %582 = vmatpush1.msra.mxu0 0.0
      %583 = vmatprep.subr.mxu0 0.0
      %584 = vmatpush1.msra.mxu0 0.0
      %585 = vmatprep.subr.mxu0 0.0
      %586 = vmatpush1.msra.mxu0 0.0
      %587 = vmatprep.subr.mxu0 0.0
      %588 = vmatpush1.msra.mxu0 0.0
      %589 = vmatprep.subr.mxu0 0.0
      %590 = vmatpush1.msra.mxu0 0.0
      %591 = vmatprep.subr.mxu0 0.0
      %592 = vmatpush1.msra.mxu0 0.0
      %593 = vmatprep.subr.mxu0 0.0
      %594 = vmatpush1.msra.mxu0 0.0
      %595 = vmatprep.subr.mxu0 0.0
      %596 = vmatpush1.msra.mxu0 0.0
      %597 = vmatprep.subr.mxu0 0.0
      %598 = vmatpush1.msra.mxu0 0.0
      %599 = vmatprep.subr.mxu0 0.0
      %600 = vmatpush1.msra.mxu0 0.0
      %601 = vmatprep.subr.mxu0 0.0
      %602 = vmatpush1.msra.mxu0 0.0
      %603 = vmatprep.subr.mxu0 0.0
      %604 = vmatpush1.msra.mxu0 0.0
      %605 = vmatprep.subr.mxu0 0.0
      %606 = vmatpush1.msra.mxu0 0.0
      %607 = vmatprep.subr.mxu0 0.0
      %608 = vmatpush1.msra.mxu0 0.0
      %609 = vmatprep.subr.mxu0 0.0
      %610 = vmatpush1.msra.mxu0 0.0
      %611 = vmatprep.subr.mxu0 0.0
      %612 = vmatpush1.msra.mxu0 0.0
      %613 = vmatprep.subr.mxu0 0.0
      %614 = vmatpush1.msra.mxu0 0.0
      %615 = vmatprep.subr.mxu0 0.0
      %616 = vmatpush1.msra.mxu0 0.0
      %617 = vmatprep.subr.mxu0 0.0
      %618 = vmatpush1.msra.mxu0 0.0
      %619 = vmatprep.subr.mxu0 0.0
      %620 = vmatpush1.msra.mxu0 0.0
      %621 = vmatprep.subr.mxu0 0.0
      %622 = vmatpush1.msra.mxu0 0.0
      %623 = vmatprep.subr.mxu0 0.0
      %624 = vmatpush1.msra.mxu0 0.0
      %625 = vmatprep.subr.mxu0 0.0
      %626 = vmatpush1.msra.mxu0 0.0
      %627 = vmatprep.subr.mxu0 0.0
      %628 = vmatpush1.msra.mxu0 0.0
      %629 = vmatprep.subr.mxu0 0.0
      %630 = vmatpush1.msra.mxu0 0.0
      %631 = vmatprep.subr.mxu0 0.0
      %632 = vmatpush1.msra.mxu0 0.0
      %633 = vmatprep.subr.mxu0 0.0
      %634 = vmatpush1.msra.mxu0 0.0
      %635 = vmatprep.subr.mxu0 0.0
      %636 = vmatpush1.msra.mxu0 0.0
      %637 = vmatprep.subr.mxu0 0.0
      %638 = vmatpush1.msra.mxu0 0.0
      %639 = vmatprep.subr.mxu0 0.0
      %640 = vmatpush1.msra.mxu0 0.0
      %641 = vmatprep.mubr.f32.mxu0 0.0
      %642 = vmatmul.mubr.f32.gmra.mrb[0].mxu0 %v471
      %v643 = vpop.f32.mrb[0].mxu0
      %v644 = vadd.f32 %v452, %v643
      %v645 = vpop.f32.mrb[0].mxu0
      %646 = vmatprep.mubr.f32.mxu0 0.0
      %647 = vmatmul.mubr.f32.gmra.mrb[0].mxu0 %v474
      %v648 = vpop.f32.mrb[0].mxu0
      %v649 = vadd.f32 %v457, %v648
      %v650 = vpop.f32.mrb[0].mxu0
      %651 = vmatprep.mubr.f32.mxu0 0.0
      %652 = vmatmul.mubr.f32.gmra.mrb[0].mxu0 %v477
      %v653 = vpop.f32.mrb[0].mxu0
      %v654 = vadd.f32 %v462, %v653
      %v655 = vpop.f32.mrb[0].mxu0
      %656 = vmatprep.mubr.f32.mxu0 0.0
      %657 = vmatmul.mubr.f32.gmra.mrb[0].mxu0 %v480
      %v658 = vpop.f32.mrb[0].mxu0
      %v659 = vadd.f32 %v467, %v658
      %v660 = vpop.f32.mrb[0].mxu0
      %661 = vdwg.mxu0
      %s662 = scalar_lea.vmem %s1, 64
      %v663 = vld [vmem:[%s662] sm:$0xff]
      %v664 = vld [vmem:[%s662 + $0x8] sm:$0xff]
      %v665 = vld [vmem:[%s662 + $0x10] sm:$0xff]
      %v666 = vld [vmem:[%s662 + $0x18] sm:$0xff]
      %667 = vrot.lane.b32.xlu0 %v249, 126
      %v668 = vpop.permute.xlu0 %667
      %669 = vrot.lane.b32.xlu0 %v262, 126
      %v670 = vpop.permute.xlu0 %669
      %671 = vrot.lane.b32.xlu0 %v250, 126
      %v672 = vpop.permute.xlu0 %671
      %673 = vrot.lane.b32.xlu0 %v263, 126
      %v674 = vpop.permute.xlu0 %673
      %vm675 = vcmask 1031168
      %v676 = vsel %vm675, %v668, %v670
      %v677 = vsel %vm675, %v670, %v672
      %v678 = vsel %vm675, %v672, %v674
      %v680 = vsel %vm276, %v663, 0
      %v683 = vsel %vm276, %v664, 0
      %v686 = vsel %vm276, %v665, 0
      %v689 = vsel %vm276, %v666, 0
      %v691 = vsel %vm289, %v676, 0
      %v693 = vsel %vm289, %v677, 0
      %v695 = vsel %vm289, %v678, 0
      %697 = vmatprep.subr.mxu0 %v693
      %698 = vmatpush1.msra.mxu0 %v691
      %699 = vmatprep.subr.mxu0 0.0
      %700 = vmatpush1.msra.mxu0 0.0
      %701 = vmatprep.subr.mxu0 0.0
      %702 = vmatpush1.msra.mxu0 0.0
      %703 = vmatprep.subr.mxu0 0.0
      %704 = vmatpush1.msra.mxu0 0.0
      %705 = vmatprep.subr.mxu0 0.0
      %706 = vmatpush1.msra.mxu0 0.0
      %707 = vmatprep.subr.mxu0 0.0
      %708 = vmatpush1.msra.mxu0 0.0
      %709 = vmatprep.subr.mxu0 0.0
      %710 = vmatpush1.msra.mxu0 0.0
      %711 = vmatprep.subr.mxu0 0.0
      %712 = vmatpush1.msra.mxu0 0.0
      %713 = vmatprep.subr.mxu0 0.0
      %714 = vmatpush1.msra.mxu0 0.0
      %715 = vmatprep.subr.mxu0 0.0
      %716 = vmatpush1.msra.mxu0 0.0
      %717 = vmatprep.subr.mxu0 0.0
      %718 = vmatpush1.msra.mxu0 0.0
      %719 = vmatprep.subr.mxu0 0.0
      %720 = vmatpush1.msra.mxu0 0.0
      %721 = vmatprep.subr.mxu0 0.0
      %722 = vmatpush1.msra.mxu0 0.0
      %723 = vmatprep.subr.mxu0 0.0
      %724 = vmatpush1.msra.mxu0 0.0
      %725 = vmatprep.subr.mxu0 0.0
      %726 = vmatpush1.msra.mxu0 0.0
      %727 = vmatprep.subr.mxu0 0.0
      %728 = vmatpush1.msra.mxu0 0.0
      %729 = vmatprep.subr.mxu0 0.0
      %730 = vmatpush1.msra.mxu0 0.0
      %731 = vmatprep.subr.mxu0 0.0
      %732 = vmatpush1.msra.mxu0 0.0
      %733 = vmatprep.subr.mxu0 0.0
      %734 = vmatpush1.msra.mxu0 0.0
      %735 = vmatprep.subr.mxu0 0.0
      %736 = vmatpush1.msra.mxu0 0.0
      %737 = vmatprep.subr.mxu0 0.0
      %738 = vmatpush1.msra.mxu0 0.0
      %739 = vmatprep.subr.mxu0 0.0
      %740 = vmatpush1.msra.mxu0 0.0
      %741 = vmatprep.subr.mxu0 0.0
      %742 = vmatpush1.msra.mxu0 0.0
      %743 = vmatprep.subr.mxu0 0.0
      %744 = vmatpush1.msra.mxu0 0.0
      %745 = vmatprep.subr.mxu0 0.0
      %746 = vmatpush1.msra.mxu0 0.0
      %747 = vmatprep.subr.mxu0 0.0
      %748 = vmatpush1.msra.mxu0 0.0
      %749 = vmatprep.subr.mxu0 0.0
      %750 = vmatpush1.msra.mxu0 0.0
      %751 = vmatprep.subr.mxu0 0.0
      %752 = vmatpush1.msra.mxu0 0.0
      %753 = vmatprep.subr.mxu0 0.0
      %754 = vmatpush1.msra.mxu0 0.0
      %755 = vmatprep.subr.mxu0 0.0
      %756 = vmatpush1.msra.mxu0 0.0
      %757 = vmatprep.subr.mxu0 0.0
      %758 = vmatpush1.msra.mxu0 0.0
      %759 = vmatprep.subr.mxu0 0.0
      %760 = vmatpush1.msra.mxu0 0.0
      %761 = vmatprep.mubr.f32.mxu0 0.0
      %762 = vmatmul.mubr.f32.gmra.mrb[0].mxu0 %v680
      %v763 = vpop.f32.mrb[0].mxu0
      %v764 = vadd.f32 0.0, %v763
      %v765 = vpop.f32.mrb[0].mxu0
      %v766 = vadd.f32 0.0, %v765
      %767 = vmatprep.mubr.f32.mxu0 0.0
      %768 = vmatmul.mubr.f32.gmra.mrb[0].mxu0 %v683
      %v769 = vpop.f32.mrb[0].mxu0
      %v770 = vadd.f32 0.0, %v769
      %v771 = vpop.f32.mrb[0].mxu0
      %v772 = vadd.f32 0.0, %v771
      %773 = vmatprep.mubr.f32.mxu0 0.0
      %774 = vmatmul.mubr.f32.gmra.mrb[0].mxu0 %v686
      %v775 = vpop.f32.mrb[0].mxu0
      %v776 = vadd.f32 0.0, %v775
      %v777 = vpop.f32.mrb[0].mxu0
      %v778 = vadd.f32 0.0, %v777
      %779 = vmatprep.mubr.f32.mxu0 0.0
      %780 = vmatmul.mubr.f32.gmra.mrb[0].mxu0 %v689
      %v781 = vpop.f32.mrb[0].mxu0
      %v782 = vadd.f32 0.0, %v781
      %v783 = vpop.f32.mrb[0].mxu0
      %v784 = vadd.f32 0.0, %v783
      %785 = vdwg.mxu0
      %786 = vmatprep.subr.mxu0 0.0
      %787 = vmatpush1.msra.mxu0 %v695
      %788 = vmatprep.subr.mxu0 0.0
      %789 = vmatpush1.msra.mxu0 0.0
      %790 = vmatprep.subr.mxu0 0.0
      %791 = vmatpush1.msra.mxu0 0.0
      %792 = vmatprep.subr.mxu0 0.0
      %793 = vmatpush1.msra.mxu0 0.0
      %794 = vmatprep.subr.mxu0 0.0
      %795 = vmatpush1.msra.mxu0 0.0
      %796 = vmatprep.subr.mxu0 0.0
      %797 = vmatpush1.msra.mxu0 0.0
      %798 = vmatprep.subr.mxu0 0.0
      %799 = vmatpush1.msra.mxu0 0.0
      %800 = vmatprep.subr.mxu0 0.0
      %801 = vmatpush1.msra.mxu0 0.0
      %802 = vmatprep.subr.mxu0 0.0
      %803 = vmatpush1.msra.mxu0 0.0
      %804 = vmatprep.subr.mxu0 0.0
      %805 = vmatpush1.msra.mxu0 0.0
      %806 = vmatprep.subr.mxu0 0.0
      %807 = vmatpush1.msra.mxu0 0.0
      %808 = vmatprep.subr.mxu0 0.0
      %809 = vmatpush1.msra.mxu0 0.0
      %810 = vmatprep.subr.mxu0 0.0
      %811 = vmatpush1.msra.mxu0 0.0
      %812 = vmatprep.subr.mxu0 0.0
      %813 = vmatpush1.msra.mxu0 0.0
      %814 = vmatprep.subr.mxu0 0.0
      %815 = vmatpush1.msra.mxu0 0.0
      %816 = vmatprep.subr.mxu0 0.0
      %817 = vmatpush1.msra.mxu0 0.0
      %818 = vmatprep.subr.mxu0 0.0
      %819 = vmatpush1.msra.mxu0 0.0
      %820 = vmatprep.subr.mxu0 0.0
      %821 = vmatpush1.msra.mxu0 0.0
      %822 = vmatprep.subr.mxu0 0.0
      %823 = vmatpush1.msra.mxu0 0.0
      %824 = vmatprep.subr.mxu0 0.0
      %825 = vmatpush1.msra.mxu0 0.0
      %826 = vmatprep.subr.mxu0 0.0
      %827 = vmatpush1.msra.mxu0 0.0
      %828 = vmatprep.subr.mxu0 0.0
      %829 = vmatpush1.msra.mxu0 0.0
      %830 = vmatprep.subr.mxu0 0.0
      %831 = vmatpush1.msra.mxu0 0.0
      %832 = vmatprep.subr.mxu0 0.0
      %833 = vmatpush1.msra.mxu0 0.0
      %834 = vmatprep.subr.mxu0 0.0
      %835 = vmatpush1.msra.mxu0 0.0
      %836 = vmatprep.subr.mxu0 0.0
      %837 = vmatpush1.msra.mxu0 0.0
      %838 = vmatprep.subr.mxu0 0.0
      %839 = vmatpush1.msra.mxu0 0.0
      %840 = vmatprep.subr.mxu0 0.0
      %841 = vmatpush1.msra.mxu0 0.0
      %842 = vmatprep.subr.mxu0 0.0
      %843 = vmatpush1.msra.mxu0 0.0
      %844 = vmatprep.subr.mxu0 0.0
      %845 = vmatpush1.msra.mxu0 0.0
      %846 = vmatprep.subr.mxu0 0.0
      %847 = vmatpush1.msra.mxu0 0.0
      %848 = vmatprep.subr.mxu0 0.0
      %849 = vmatpush1.msra.mxu0 0.0
      %850 = vmatprep.mubr.f32.mxu0 0.0
      %851 = vmatmul.mubr.f32.gmra.mrb[0].mxu0 %v680
      %v852 = vpop.f32.mrb[0].mxu0
      %v853 = vadd.f32 0.0, %v852
      %v854 = vpop.f32.mrb[0].mxu0
      %855 = vmatprep.mubr.f32.mxu0 0.0
      %856 = vmatmul.mubr.f32.gmra.mrb[0].mxu0 %v683
      %v857 = vpop.f32.mrb[0].mxu0
      %v858 = vadd.f32 0.0, %v857
      %v859 = vpop.f32.mrb[0].mxu0
      %860 = vmatprep.mubr.f32.mxu0 0.0
      %861 = vmatmul.mubr.f32.gmra.mrb[0].mxu0 %v686
      %v862 = vpop.f32.mrb[0].mxu0
      %v863 = vadd.f32 0.0, %v862
      %v864 = vpop.f32.mrb[0].mxu0
      %865 = vmatprep.mubr.f32.mxu0 0.0
      %866 = vmatmul.mubr.f32.gmra.mrb[0].mxu0 %v689
      %v867 = vpop.f32.mrb[0].mxu0
      %v868 = vadd.f32 0.0, %v867
      %v869 = vpop.f32.mrb[0].mxu0
      %870 = vdwg.mxu0
      %v871 = vadd.f32 %v555, %v764
      %v872 = vadd.f32 %v557, %v766
      %v873 = vadd.f32 %v644, %v853
      %v874 = vadd.f32 %v561, %v770
      %v875 = vadd.f32 %v563, %v772
      %v876 = vadd.f32 %v649, %v858
      %v877 = vadd.f32 %v567, %v776
      %v878 = vadd.f32 %v569, %v778
      %v879 = vadd.f32 %v654, %v863
      %v880 = vadd.f32 %v573, %v782
      %v881 = vadd.f32 %v575, %v784
      %v882 = vadd.f32 %v659, %v868
      %s883 = scalar_lea.vmem %s1, 96
      %v884 = vld [vmem:[%s883] sm:$0xff]
      %v885 = vld [vmem:[%s883 + $0x8] sm:$0xff]
      %v886 = vld [vmem:[%s883 + $0x10] sm:$0xff]
      %v887 = vld [vmem:[%s883 + $0x18] sm:$0xff]
      %888 = vrot.lane.b32.xlu0 %v249, 110
      %v889 = vpop.permute.xlu0 %888
      %890 = vrot.lane.b32.xlu0 %v262, 110
      %v891 = vpop.permute.xlu0 %890
      %892 = vrot.lane.b32.xlu0 %v250, 110
      %v893 = vpop.permute.xlu0 %892
      %894 = vrot.lane.b32.xlu0 %v263, 110
      %v895 = vpop.permute.xlu0 %894
      %vm896 = vcmask 900096
      %v897 = vsel %vm896, %v889, %v891
      %v898 = vsel %vm896, %v891, %v893
      %v899 = vsel %vm896, %v893, %v895
      %v901 = vsel %vm276, %v884, 0
      %v904 = vsel %vm276, %v885, 0
      %v907 = vsel %vm276, %v886, 0
      %v910 = vsel %vm276, %v887, 0
      %v912 = vsel %vm289, %v897, 0
      %v914 = vsel %vm289, %v898, 0
      %v916 = vsel %vm289, %v899, 0
      %918 = vmatprep.subr.mxu0 %v914
      %919 = vmatpush1.msra.mxu0 %v912
      %920 = vmatprep.subr.mxu0 0.0
      %921 = vmatpush1.msra.mxu0 0.0
      %922 = vmatprep.subr.mxu0 0.0
      %923 = vmatpush1.msra.mxu0 0.0
      %924 = vmatprep.subr.mxu0 0.0
      %925 = vmatpush1.msra.mxu0 0.0
      %926 = vmatprep.subr.mxu0 0.0
      %927 = vmatpush1.msra.mxu0 0.0
      %928 = vmatprep.subr.mxu0 0.0
      %929 = vmatpush1.msra.mxu0 0.0
      %930 = vmatprep.subr.mxu0 0.0
      %931 = vmatpush1.msra.mxu0 0.0
      %932 = vmatprep.subr.mxu0 0.0
      %933 = vmatpush1.msra.mxu0 0.0
      %934 = vmatprep.subr.mxu0 0.0
      %935 = vmatpush1.msra.mxu0 0.0
      %936 = vmatprep.subr.mxu0 0.0
      %937 = vmatpush1.msra.mxu0 0.0
      %938 = vmatprep.subr.mxu0 0.0
      %939 = vmatpush1.msra.mxu0 0.0
      %940 = vmatprep.subr.mxu0 0.0
      %941 = vmatpush1.msra.mxu0 0.0
      %942 = vmatprep.subr.mxu0 0.0
      %943 = vmatpush1.msra.mxu0 0.0
      %944 = vmatprep.subr.mxu0 0.0
      %945 = vmatpush1.msra.mxu0 0.0
      %946 = vmatprep.subr.mxu0 0.0
      %947 = vmatpush1.msra.mxu0 0.0
      %948 = vmatprep.subr.mxu0 0.0
      %949 = vmatpush1.msra.mxu0 0.0
      %950 = vmatprep.subr.mxu0 0.0
      %951 = vmatpush1.msra.mxu0 0.0
      %952 = vmatprep.subr.mxu0 0.0
      %953 = vmatpush1.msra.mxu0 0.0
      %954 = vmatprep.subr.mxu0 0.0
      %955 = vmatpush1.msra.mxu0 0.0
      %956 = vmatprep.subr.mxu0 0.0
      %957 = vmatpush1.msra.mxu0 0.0
      %958 = vmatprep.subr.mxu0 0.0
      %959 = vmatpush1.msra.mxu0 0.0
      %960 = vmatprep.subr.mxu0 0.0
      %961 = vmatpush1.msra.mxu0 0.0
      %962 = vmatprep.subr.mxu0 0.0
      %963 = vmatpush1.msra.mxu0 0.0
      %964 = vmatprep.subr.mxu0 0.0
      %965 = vmatpush1.msra.mxu0 0.0
      %966 = vmatprep.subr.mxu0 0.0
      %967 = vmatpush1.msra.mxu0 0.0
      %968 = vmatprep.subr.mxu0 0.0
      %969 = vmatpush1.msra.mxu0 0.0
      %970 = vmatprep.subr.mxu0 0.0
      %971 = vmatpush1.msra.mxu0 0.0
      %972 = vmatprep.subr.mxu0 0.0
      %973 = vmatpush1.msra.mxu0 0.0
      %974 = vmatprep.subr.mxu0 0.0
      %975 = vmatpush1.msra.mxu0 0.0
      %976 = vmatprep.subr.mxu0 0.0
      %977 = vmatpush1.msra.mxu0 0.0
      %978 = vmatprep.subr.mxu0 0.0
      %979 = vmatpush1.msra.mxu0 0.0
      %980 = vmatprep.subr.mxu0 0.0
      %981 = vmatpush1.msra.mxu0 0.0
      %982 = vmatprep.mubr.f32.mxu0 0.0
      %983 = vmatmul.mubr.f32.gmra.mrb[0].mxu0 %v901
      %v984 = vpop.f32.mrb[0].mxu0
      %v985 = vadd.f32 0.0, %v984
      %v986 = vpop.f32.mrb[0].mxu0
      %v987 = vadd.f32 0.0, %v986
      %988 = vmatprep.mubr.f32.mxu0 0.0
      %989 = vmatmul.mubr.f32.gmra.mrb[0].mxu0 %v904
      %v990 = vpop.f32.mrb[0].mxu0
      %v991 = vadd.f32 0.0, %v990
      %v992 = vpop.f32.mrb[0].mxu0
      %v993 = vadd.f32 0.0, %v992
      %994 = vmatprep.mubr.f32.mxu0 0.0
      %995 = vmatmul.mubr.f32.gmra.mrb[0].mxu0 %v907
      %v996 = vpop.f32.mrb[0].mxu0
      %v997 = vadd.f32 0.0, %v996
      %v998 = vpop.f32.mrb[0].mxu0
      %v999 = vadd.f32 0.0, %v998
      %1000 = vmatprep.mubr.f32.mxu0 0.0
      %1001 = vmatmul.mubr.f32.gmra.mrb[0].mxu0 %v910
      %v1002 = vpop.f32.mrb[0].mxu0
      %v1003 = vadd.f32 0.0, %v1002
      %v1004 = vpop.f32.mrb[0].mxu0
      %v1005 = vadd.f32 0.0, %v1004
      %1006 = vdwg.mxu0
      %1007 = vmatprep.subr.mxu0 0.0
      %1008 = vmatpush1.msra.mxu0 %v916
      %1009 = vmatprep.subr.mxu0 0.0
      %1010 = vmatpush1.msra.mxu0 0.0
      %1011 = vmatprep.subr.mxu0 0.0
      %1012 = vmatpush1.msra.mxu0 0.0
      %1013 = vmatprep.subr.mxu0 0.0
      %1014 = vmatpush1.msra.mxu0 0.0
      %1015 = vmatprep.subr.mxu0 0.0
      %1016 = vmatpush1.msra.mxu0 0.0
      %1017 = vmatprep.subr.mxu0 0.0
      %1018 = vmatpush1.msra.mxu0 0.0
      %1019 = vmatprep.subr.mxu0 0.0
      %1020 = vmatpush1.msra.mxu0 0.0
      %1021 = vmatprep.subr.mxu0 0.0
      %1022 = vmatpush1.msra.mxu0 0.0
      %1023 = vmatprep.subr.mxu0 0.0
      %1024 = vmatpush1.msra.mxu0 0.0
      %1025 = vmatprep.subr.mxu0 0.0
      %1026 = vmatpush1.msra.mxu0 0.0
      %1027 = vmatprep.subr.mxu0 0.0
      %1028 = vmatpush1.msra.mxu0 0.0
      %1029 = vmatprep.subr.mxu0 0.0
      %1030 = vmatpush1.msra.mxu0 0.0
      %1031 = vmatprep.subr.mxu0 0.0
      %1032 = vmatpush1.msra.mxu0 0.0
      %1033 = vmatprep.subr.mxu0 0.0
      %1034 = vmatpush1.msra.mxu0 0.0
      %1035 = vmatprep.subr.mxu0 0.0
      %1036 = vmatpush1.msra.mxu0 0.0
      %1037 = vmatprep.subr.mxu0 0.0
      %1038 = vmatpush1.msra.mxu0 0.0
      %1039 = vmatprep.subr.mxu0 0.0
      %1040 = vmatpush1.msra.mxu0 0.0
      %1041 = vmatprep.subr.mxu0 0.0
      %1042 = vmatpush1.msra.mxu0 0.0
      %1043 = vmatprep.subr.mxu0 0.0
      %1044 = vmatpush1.msra.mxu0 0.0
      %1045 = vmatprep.subr.mxu0 0.0
      %1046 = vmatpush1.msra.mxu0 0.0
      %1047 = vmatprep.subr.mxu0 0.0
      %1048 = vmatpush1.msra.mxu0 0.0
      %1049 = vmatprep.subr.mxu0 0.0
      %1050 = vmatpush1.msra.mxu0 0.0
      %1051 = vmatprep.subr.mxu0 0.0
      %1052 = vmatpush1.msra.mxu0 0.0
      %1053 = vmatprep.subr.mxu0 0.0
      %1054 = vmatpush1.msra.mxu0 0.0
      %1055 = vmatprep.subr.mxu0 0.0
      %1056 = vmatpush1.msra.mxu0 0.0
      %1057 = vmatprep.subr.mxu0 0.0
      %1058 = vmatpush1.msra.mxu0 0.0
      %1059 = vmatprep.subr.mxu0 0.0
      %1060 = vmatpush1.msra.mxu0 0.0
      %1061 = vmatprep.subr.mxu0 0.0
      %1062 = vmatpush1.msra.mxu0 0.0
      %1063 = vmatprep.subr.mxu0 0.0
      %1064 = vmatpush1.msra.mxu0 0.0
      %1065 = vmatprep.subr.mxu0 0.0
      %1066 = vmatpush1.msra.mxu0 0.0
      %1067 = vmatprep.subr.mxu0 0.0
      %1068 = vmatpush1.msra.mxu0 0.0
      %1069 = vmatprep.subr.mxu0 0.0
      %1070 = vmatpush1.msra.mxu0 0.0
      %1071 = vmatprep.mubr.f32.mxu0 0.0
      %1072 = vmatmul.mubr.f32.gmra.mrb[0].mxu0 %v901
      %v1073 = vpop.f32.mrb[0].mxu0
      %v1074 = vadd.f32 0.0, %v1073
      %v1075 = vpop.f32.mrb[0].mxu0
      %1076 = vmatprep.mubr.f32.mxu0 0.0
      %1077 = vmatmul.mubr.f32.gmra.mrb[0].mxu0 %v904
      %v1078 = vpop.f32.mrb[0].mxu0
      %v1079 = vadd.f32 0.0, %v1078
      %v1080 = vpop.f32.mrb[0].mxu0
      %1081 = vmatprep.mubr.f32.mxu0 0.0
      %1082 = vmatmul.mubr.f32.gmra.mrb[0].mxu0 %v907
      %v1083 = vpop.f32.mrb[0].mxu0
      %v1084 = vadd.f32 0.0, %v1083
      %v1085 = vpop.f32.mrb[0].mxu0
      %1086 = vmatprep.mubr.f32.mxu0 0.0
      %1087 = vmatmul.mubr.f32.gmra.mrb[0].mxu0 %v910
      %v1088 = vpop.f32.mrb[0].mxu0
      %v1089 = vadd.f32 0.0, %v1088
      %v1090 = vpop.f32.mrb[0].mxu0
      %1091 = vdwg.mxu0
      %v1092 = vadd.f32 %v871, %v985
      %v1093 = vadd.f32 %v872, %v987
      %v1094 = vadd.f32 %v873, %v1074
      %v1095 = vadd.f32 %v874, %v991
      %v1096 = vadd.f32 %v875, %v993
      %v1097 = vadd.f32 %v876, %v1079
      %v1098 = vadd.f32 %v877, %v997
      %v1099 = vadd.f32 %v878, %v999
      %v1100 = vadd.f32 %v879, %v1084
      %v1101 = vadd.f32 %v880, %v1003
      %v1102 = vadd.f32 %v881, %v1005
      %v1103 = vadd.f32 %v882, %v1089
      %s1104 = scalar_lea.vmem %s1, 128
      %v1105 = vld [vmem:[%s1104] sm:$0xff]
      %v1106 = vld [vmem:[%s1104 + $0x8] sm:$0xff]
      %v1107 = vld [vmem:[%s1104 + $0x10] sm:$0xff]
      %v1108 = vld [vmem:[%s1104 + $0x18] sm:$0xff]
      %1109 = vrot.lane.b32.xlu0 %v249, 109
      %v1110 = vpop.permute.xlu0 %1109
      %1111 = vrot.lane.b32.xlu0 %v262, 109
      %v1112 = vpop.permute.xlu0 %1111
      %1113 = vrot.lane.b32.xlu0 %v250, 109
      %v1114 = vpop.permute.xlu0 %1113
      %1115 = vrot.lane.b32.xlu0 %v263, 109
      %v1116 = vpop.permute.xlu0 %1115
      %vm1117 = vcmask 891904
      %v1118 = vsel %vm1117, %v1110, %v1112
      %v1119 = vsel %vm1117, %v1112, %v1114
      %v1120 = vsel %vm1117, %v1114, %v1116
      %v1122 = vsel %vm276, %v1105, 0
      %v1125 = vsel %vm276, %v1106, 0
      %v1128 = vsel %vm276, %v1107, 0
      %v1131 = vsel %vm276, %v1108, 0
      %v1133 = vsel %vm289, %v1118, 0
      %v1135 = vsel %vm289, %v1119, 0
      %v1137 = vsel %vm289, %v1120, 0
      %1139 = vmatprep.subr.mxu0 %v1135
      %1140 = vmatpush1.msra.mxu0 %v1133
      %1141 = vmatprep.subr.mxu0 0.0
      %1142 = vmatpush1.msra.mxu0 0.0
      %1143 = vmatprep.subr.mxu0 0.0
      %1144 = vmatpush1.msra.mxu0 0.0
      %1145 = vmatprep.subr.mxu0 0.0
      %1146 = vmatpush1.msra.mxu0 0.0
      %1147 = vmatprep.subr.mxu0 0.0
      %1148 = vmatpush1.msra.mxu0 0.0
      %1149 = vmatprep.subr.mxu0 0.0
      %1150 = vmatpush1.msra.mxu0 0.0
      %1151 = vmatprep.subr.mxu0 0.0
      %1152 = vmatpush1.msra.mxu0 0.0
      %1153 = vmatprep.subr.mxu0 0.0
      %1154 = vmatpush1.msra.mxu0 0.0
      %1155 = vmatprep.subr.mxu0 0.0
      %1156 = vmatpush1.msra.mxu0 0.0
      %1157 = vmatprep.subr.mxu0 0.0
      %1158 = vmatpush1.msra.mxu0 0.0
      %1159 = vmatprep.subr.mxu0 0.0
      %1160 = vmatpush1.msra.mxu0 0.0
      %1161 = vmatprep.subr.mxu0 0.0
      %1162 = vmatpush1.msra.mxu0 0.0
      %1163 = vmatprep.subr.mxu0 0.0
      %1164 = vmatpush1.msra.mxu0 0.0
      %1165 = vmatprep.subr.mxu0 0.0
      %1166 = vmatpush1.msra.mxu0 0.0
      %1167 = vmatprep.subr.mxu0 0.0
      %1168 = vmatpush1.msra.mxu0 0.0
      %1169 = vmatprep.subr.mxu0 0.0
      %1170 = vmatpush1.msra.mxu0 0.0
      %1171 = vmatprep.subr.mxu0 0.0
      %1172 = vmatpush1.msra.mxu0 0.0
      %1173 = vmatprep.subr.mxu0 0.0
      %1174 = vmatpush1.msra.mxu0 0.0
      %1175 = vmatprep.subr.mxu0 0.0
      %1176 = vmatpush1.msra.mxu0 0.0
      %1177 = vmatprep.subr.mxu0 0.0
      %1178 = vmatpush1.msra.mxu0 0.0
      %1179 = vmatprep.subr.mxu0 0.0
      %1180 = vmatpush1.msra.mxu0 0.0
      %1181 = vmatprep.subr.mxu0 0.0
      %1182 = vmatpush1.msra.mxu0 0.0
      %1183 = vmatprep.subr.mxu0 0.0
      %1184 = vmatpush1.msra.mxu0 0.0
      %1185 = vmatprep.subr.mxu0 0.0
      %1186 = vmatpush1.msra.mxu0 0.0
      %1187 = vmatprep.subr.mxu0 0.0
      %1188 = vmatpush1.msra.mxu0 0.0
      %1189 = vmatprep.subr.mxu0 0.0
      %1190 = vmatpush1.msra.mxu0 0.0
      %1191 = vmatprep.subr.mxu0 0.0
      %1192 = vmatpush1.msra.mxu0 0.0
      %1193 = vmatprep.subr.mxu0 0.0
      %1194 = vmatpush1.msra.mxu0 0.0
      %1195 = vmatprep.subr.mxu0 0.0
      %1196 = vmatpush1.msra.mxu0 0.0
      %1197 = vmatprep.subr.mxu0 0.0
      %1198 = vmatpush1.msra.mxu0 0.0
      %1199 = vmatprep.subr.mxu0 0.0
      %1200 = vmatpush1.msra.mxu0 0.0
      %1201 = vmatprep.subr.mxu0 0.0
      %1202 = vmatpush1.msra.mxu0 0.0
      %1203 = vmatprep.mubr.f32.mxu0 0.0
      %1204 = vmatmul.mubr.f32.gmra.mrb[0].mxu0 %v1122
      %v1205 = vpop.f32.mrb[0].mxu0
      %v1206 = vadd.f32 0.0, %v1205
      %v1207 = vpop.f32.mrb[0].mxu0
      %v1208 = vadd.f32 0.0, %v1207
      %1209 = vmatprep.mubr.f32.mxu0 0.0
      %1210 = vmatmul.mubr.f32.gmra.mrb[0].mxu0 %v1125
      %v1211 = vpop.f32.mrb[0].mxu0
      %v1212 = vadd.f32 0.0, %v1211
      %v1213 = vpop.f32.mrb[0].mxu0
      %v1214 = vadd.f32 0.0, %v1213
      %1215 = vmatprep.mubr.f32.mxu0 0.0
      %1216 = vmatmul.mubr.f32.gmra.mrb[0].mxu0 %v1128
      %v1217 = vpop.f32.mrb[0].mxu0
      %v1218 = vadd.f32 0.0, %v1217
      %v1219 = vpop.f32.mrb[0].mxu0
      %v1220 = vadd.f32 0.0, %v1219
      %1221 = vmatprep.mubr.f32.mxu0 0.0
      %1222 = vmatmul.mubr.f32.gmra.mrb[0].mxu0 %v1131
      %v1223 = vpop.f32.mrb[0].mxu0
      %v1224 = vadd.f32 0.0, %v1223
      %v1225 = vpop.f32.mrb[0].mxu0
      %v1226 = vadd.f32 0.0, %v1225
      %1227 = vdwg.mxu0
      %1228 = vmatprep.subr.mxu0 0.0
      %1229 = vmatpush1.msra.mxu0 %v1137
      %1230 = vmatprep.subr.mxu0 0.0
      %1231 = vmatpush1.msra.mxu0 0.0
      %1232 = vmatprep.subr.mxu0 0.0
      %1233 = vmatpush1.msra.mxu0 0.0
      %1234 = vmatprep.subr.mxu0 0.0
      %1235 = vmatpush1.msra.mxu0 0.0
      %1236 = vmatprep.subr.mxu0 0.0
      %1237 = vmatpush1.msra.mxu0 0.0
      %1238 = vmatprep.subr.mxu0 0.0
      %1239 = vmatpush1.msra.mxu0 0.0
      %1240 = vmatprep.subr.mxu0 0.0
      %1241 = vmatpush1.msra.mxu0 0.0
      %1242 = vmatprep.subr.mxu0 0.0
      %1243 = vmatpush1.msra.mxu0 0.0
      %1244 = vmatprep.subr.mxu0 0.0
      %1245 = vmatpush1.msra.mxu0 0.0
      %1246 = vmatprep.subr.mxu0 0.0
      %1247 = vmatpush1.msra.mxu0 0.0
      %1248 = vmatprep.subr.mxu0 0.0
      %1249 = vmatpush1.msra.mxu0 0.0
      %1250 = vmatprep.subr.mxu0 0.0
      %1251 = vmatpush1.msra.mxu0 0.0
      %1252 = vmatprep.subr.mxu0 0.0
      %1253 = vmatpush1.msra.mxu0 0.0
      %1254 = vmatprep.subr.mxu0 0.0
      %1255 = vmatpush1.msra.mxu0 0.0
      %1256 = vmatprep.subr.mxu0 0.0
      %1257 = vmatpush1.msra.mxu0 0.0
      %1258 = vmatprep.subr.mxu0 0.0
      %1259 = vmatpush1.msra.mxu0 0.0
      %1260 = vmatprep.subr.mxu0 0.0
      %1261 = vmatpush1.msra.mxu0 0.0
      %1262 = vmatprep.subr.mxu0 0.0
      %1263 = vmatpush1.msra.mxu0 0.0
      %1264 = vmatprep.subr.mxu0 0.0
      %1265 = vmatpush1.msra.mxu0 0.0
      %1266 = vmatprep.subr.mxu0 0.0
      %1267 = vmatpush1.msra.mxu0 0.0
      %1268 = vmatprep.subr.mxu0 0.0
      %1269 = vmatpush1.msra.mxu0 0.0
      %1270 = vmatprep.subr.mxu0 0.0
      %1271 = vmatpush1.msra.mxu0 0.0
      %1272 = vmatprep.subr.mxu0 0.0
      %1273 = vmatpush1.msra.mxu0 0.0
      %1274 = vmatprep.subr.mxu0 0.0
      %1275 = vmatpush1.msra.mxu0 0.0
      %1276 = vmatprep.subr.mxu0 0.0
      %1277 = vmatpush1.msra.mxu0 0.0
      %1278 = vmatprep.subr.mxu0 0.0
      %1279 = vmatpush1.msra.mxu0 0.0
      %1280 = vmatprep.subr.mxu0 0.0
      %1281 = vmatpush1.msra.mxu0 0.0
      %1282 = vmatprep.subr.mxu0 0.0
      %1283 = vmatpush1.msra.mxu0 0.0
      %1284 = vmatprep.subr.mxu0 0.0
      %1285 = vmatpush1.msra.mxu0 0.0
      %1286 = vmatprep.subr.mxu0 0.0
      %1287 = vmatpush1.msra.mxu0 0.0
      %1288 = vmatprep.subr.mxu0 0.0
      %1289 = vmatpush1.msra.mxu0 0.0
      %1290 = vmatprep.subr.mxu0 0.0
      %1291 = vmatpush1.msra.mxu0 0.0
      %1292 = vmatprep.mubr.f32.mxu0 0.0
      %1293 = vmatmul.mubr.f32.gmra.mrb[0].mxu0 %v1122
      %v1294 = vpop.f32.mrb[0].mxu0
      %v1295 = vadd.f32 0.0, %v1294
      %v1296 = vpop.f32.mrb[0].mxu0
      %1297 = vmatprep.mubr.f32.mxu0 0.0
      %1298 = vmatmul.mubr.f32.gmra.mrb[0].mxu0 %v1125
      %v1299 = vpop.f32.mrb[0].mxu0
      %v1300 = vadd.f32 0.0, %v1299
      %v1301 = vpop.f32.mrb[0].mxu0
      %1302 = vmatprep.mubr.f32.mxu0 0.0
      %1303 = vmatmul.mubr.f32.gmra.mrb[0].mxu0 %v1128
      %v1304 = vpop.f32.mrb[0].mxu0
      %v1305 = vadd.f32 0.0, %v1304
      %v1306 = vpop.f32.mrb[0].mxu0
      %1307 = vmatprep.mubr.f32.mxu0 0.0
      %1308 = vmatmul.mubr.f32.gmra.mrb[0].mxu0 %v1131
      %v1309 = vpop.f32.mrb[0].mxu0
      %v1310 = vadd.f32 0.0, %v1309
      %v1311 = vpop.f32.mrb[0].mxu0
      %1312 = vdwg.mxu0
      %v1313 = vadd.f32 %v1092, %v1206
      %v1314 = vadd.f32 %v1093, %v1208
      %v1315 = vadd.f32 %v1094, %v1295
      %v1316 = vadd.f32 %v1095, %v1212
      %v1317 = vadd.f32 %v1096, %v1214
      %v1318 = vadd.f32 %v1097, %v1300
      %v1319 = vadd.f32 %v1098, %v1218
      %v1320 = vadd.f32 %v1099, %v1220
      %v1321 = vadd.f32 %v1100, %v1305
      %v1322 = vadd.f32 %v1101, %v1224
      %v1323 = vadd.f32 %v1102, %v1226
      %v1324 = vadd.f32 %v1103, %v1310
      %s1325 = scalar_lea.vmem %s1, 160
      %v1326 = vld [vmem:[%s1325] sm:$0xff]
      %v1327 = vld [vmem:[%s1325 + $0x8] sm:$0xff]
      %v1328 = vld [vmem:[%s1325 + $0x10] sm:$0xff]
      %v1329 = vld [vmem:[%s1325 + $0x18] sm:$0xff]
      %1330 = vrot.lane.b32.xlu0 %v249, 108
      %v1331 = vpop.permute.xlu0 %1330
      %1332 = vrot.lane.b32.xlu0 %v262, 108
      %v1333 = vpop.permute.xlu0 %1332
      %1334 = vrot.lane.b32.xlu0 %v250, 108
      %v1335 = vpop.permute.xlu0 %1334
      %1336 = vrot.lane.b32.xlu0 %v263, 108
      %v1337 = vpop.permute.xlu0 %1336
      %vm1338 = vcmask 883712
      %v1339 = vsel %vm1338, %v1331, %v1333
      %v1340 = vsel %vm1338, %v1333, %v1335
      %v1341 = vsel %vm1338, %v1335, %v1337
      %v1343 = vsel %vm276, %v1326, 0
      %v1346 = vsel %vm276, %v1327, 0
      %v1349 = vsel %vm276, %v1328, 0
      %v1352 = vsel %vm276, %v1329, 0
      %v1354 = vsel %vm289, %v1339, 0
      %v1356 = vsel %vm289, %v1340, 0
      %v1358 = vsel %vm289, %v1341, 0
      %1360 = vmatprep.subr.mxu0 %v1356
      %1361 = vmatpush1.msra.mxu0 %v1354
      %1362 = vmatprep.subr.mxu0 0.0
      %1363 = vmatpush1.msra.mxu0 0.0
      %1364 = vmatprep.subr.mxu0 0.0
      %1365 = vmatpush1.msra.mxu0 0.0
      %1366 = vmatprep.subr.mxu0 0.0
      %1367 = vmatpush1.msra.mxu0 0.0
      %1368 = vmatprep.subr.mxu0 0.0
      %1369 = vmatpush1.msra.mxu0 0.0
      %1370 = vmatprep.subr.mxu0 0.0
      %1371 = vmatpush1.msra.mxu0 0.0
      %1372 = vmatprep.subr.mxu0 0.0
      %1373 = vmatpush1.msra.mxu0 0.0
      %1374 = vmatprep.subr.mxu0 0.0
      %1375 = vmatpush1.msra.mxu0 0.0
      %1376 = vmatprep.subr.mxu0 0.0
      %1377 = vmatpush1.msra.mxu0 0.0
      %1378 = vmatprep.subr.mxu0 0.0
      %1379 = vmatpush1.msra.mxu0 0.0
      %1380 = vmatprep.subr.mxu0 0.0
      %1381 = vmatpush1.msra.mxu0 0.0
      %1382 = vmatprep.subr.mxu0 0.0
      %1383 = vmatpush1.msra.mxu0 0.0
      %1384 = vmatprep.subr.mxu0 0.0
      %1385 = vmatpush1.msra.mxu0 0.0
      %1386 = vmatprep.subr.mxu0 0.0
      %1387 = vmatpush1.msra.mxu0 0.0
      %1388 = vmatprep.subr.mxu0 0.0
      %1389 = vmatpush1.msra.mxu0 0.0
      %1390 = vmatprep.subr.mxu0 0.0
      %1391 = vmatpush1.msra.mxu0 0.0
      %1392 = vmatprep.subr.mxu0 0.0
      %1393 = vmatpush1.msra.mxu0 0.0
      %1394 = vmatprep.subr.mxu0 0.0
      %1395 = vmatpush1.msra.mxu0 0.0
      %1396 = vmatprep.subr.mxu0 0.0
      %1397 = vmatpush1.msra.mxu0 0.0
      %1398 = vmatprep.subr.mxu0 0.0
      %1399 = vmatpush1.msra.mxu0 0.0
      %1400 = vmatprep.subr.mxu0 0.0
      %1401 = vmatpush1.msra.mxu0 0.0
      %1402 = vmatprep.subr.mxu0 0.0
      %1403 = vmatpush1.msra.mxu0 0.0
      %1404 = vmatprep.subr.mxu0 0.0
      %1405 = vmatpush1.msra.mxu0 0.0
      %1406 = vmatprep.subr.mxu0 0.0
      %1407 = vmatpush1.msra.mxu0 0.0
      %1408 = vmatprep.subr.mxu0 0.0
      %1409 = vmatpush1.msra.mxu0 0.0
      %1410 = vmatprep.subr.mxu0 0.0
      %1411 = vmatpush1.msra.mxu0 0.0
      %1412 = vmatprep.subr.mxu0 0.0
      %1413 = vmatpush1.msra.mxu0 0.0
      %1414 = vmatprep.subr.mxu0 0.0
      %1415 = vmatpush1.msra.mxu0 0.0
      %1416 = vmatprep.subr.mxu0 0.0
      %1417 = vmatpush1.msra.mxu0 0.0
      %1418 = vmatprep.subr.mxu0 0.0
      %1419 = vmatpush1.msra.mxu0 0.0
      %1420 = vmatprep.subr.mxu0 0.0
      %1421 = vmatpush1.msra.mxu0 0.0
      %1422 = vmatprep.subr.mxu0 0.0
      %1423 = vmatpush1.msra.mxu0 0.0
      %1424 = vmatprep.mubr.f32.mxu0 0.0
      %1425 = vmatmul.mubr.f32.gmra.mrb[0].mxu0 %v1343
      %v1426 = vpop.f32.mrb[0].mxu0
      %v1427 = vadd.f32 0.0, %v1426
      %v1428 = vpop.f32.mrb[0].mxu0
      %v1429 = vadd.f32 0.0, %v1428
      %1430 = vmatprep.mubr.f32.mxu0 0.0
      %1431 = vmatmul.mubr.f32.gmra.mrb[0].mxu0 %v1346
      %v1432 = vpop.f32.mrb[0].mxu0
      %v1433 = vadd.f32 0.0, %v1432
      %v1434 = vpop.f32.mrb[0].mxu0
      %v1435 = vadd.f32 0.0, %v1434
      %1436 = vmatprep.mubr.f32.mxu0 0.0
      %1437 = vmatmul.mubr.f32.gmra.mrb[0].mxu0 %v1349
      %v1438 = vpop.f32.mrb[0].mxu0
      %v1439 = vadd.f32 0.0, %v1438
      %v1440 = vpop.f32.mrb[0].mxu0
      %v1441 = vadd.f32 0.0, %v1440
      %1442 = vmatprep.mubr.f32.mxu0 0.0
      %1443 = vmatmul.mubr.f32.gmra.mrb[0].mxu0 %v1352
      %v1444 = vpop.f32.mrb[0].mxu0
      %v1445 = vadd.f32 0.0, %v1444
      %v1446 = vpop.f32.mrb[0].mxu0
      %v1447 = vadd.f32 0.0, %v1446
      %1448 = vdwg.mxu0
      %1449 = vmatprep.subr.mxu0 0.0
      %1450 = vmatpush1.msra.mxu0 %v1358
      %1451 = vmatprep.subr.mxu0 0.0
      %1452 = vmatpush1.msra.mxu0 0.0
      %1453 = vmatprep.subr.mxu0 0.0
      %1454 = vmatpush1.msra.mxu0 0.0
      %1455 = vmatprep.subr.mxu0 0.0
      %1456 = vmatpush1.msra.mxu0 0.0
      %1457 = vmatprep.subr.mxu0 0.0
      %1458 = vmatpush1.msra.mxu0 0.0
      %1459 = vmatprep.subr.mxu0 0.0
      %1460 = vmatpush1.msra.mxu0 0.0
      %1461 = vmatprep.subr.mxu0 0.0
      %1462 = vmatpush1.msra.mxu0 0.0
      %1463 = vmatprep.subr.mxu0 0.0
      %1464 = vmatpush1.msra.mxu0 0.0
      %1465 = vmatprep.subr.mxu0 0.0
      %1466 = vmatpush1.msra.mxu0 0.0
      %1467 = vmatprep.subr.mxu0 0.0
      %1468 = vmatpush1.msra.mxu0 0.0
      %1469 = vmatprep.subr.mxu0 0.0
      %1470 = vmatpush1.msra.mxu0 0.0
      %1471 = vmatprep.subr.mxu0 0.0
      %1472 = vmatpush1.msra.mxu0 0.0
      %1473 = vmatprep.subr.mxu0 0.0
      %1474 = vmatpush1.msra.mxu0 0.0
      %1475 = vmatprep.subr.mxu0 0.0
      %1476 = vmatpush1.msra.mxu0 0.0
      %1477 = vmatprep.subr.mxu0 0.0
      %1478 = vmatpush1.msra.mxu0 0.0
      %1479 = vmatprep.subr.mxu0 0.0
      %1480 = vmatpush1.msra.mxu0 0.0
      %1481 = vmatprep.subr.mxu0 0.0
      %1482 = vmatpush1.msra.mxu0 0.0
      %1483 = vmatprep.subr.mxu0 0.0
      %1484 = vmatpush1.msra.mxu0 0.0
      %1485 = vmatprep.subr.mxu0 0.0
      %1486 = vmatpush1.msra.mxu0 0.0
      %1487 = vmatprep.subr.mxu0 0.0
      %1488 = vmatpush1.msra.mxu0 0.0
      %1489 = vmatprep.subr.mxu0 0.0
      %1490 = vmatpush1.msra.mxu0 0.0
      %1491 = vmatprep.subr.mxu0 0.0
      %1492 = vmatpush1.msra.mxu0 0.0
      %1493 = vmatprep.subr.mxu0 0.0
      %1494 = vmatpush1.msra.mxu0 0.0
      %1495 = vmatprep.subr.mxu0 0.0
      %1496 = vmatpush1.msra.mxu0 0.0
      %1497 = vmatprep.subr.mxu0 0.0
      %1498 = vmatpush1.msra.mxu0 0.0
      %1499 = vmatprep.subr.mxu0 0.0
      %1500 = vmatpush1.msra.mxu0 0.0
      %1501 = vmatprep.subr.mxu0 0.0
      %1502 = vmatpush1.msra.mxu0 0.0
      %1503 = vmatprep.subr.mxu0 0.0
      %1504 = vmatpush1.msra.mxu0 0.0
      %1505 = vmatprep.subr.mxu0 0.0
      %1506 = vmatpush1.msra.mxu0 0.0
      %1507 = vmatprep.subr.mxu0 0.0
      %1508 = vmatpush1.msra.mxu0 0.0
      %1509 = vmatprep.subr.mxu0 0.0
      %1510 = vmatpush1.msra.mxu0 0.0
      %1511 = vmatprep.subr.mxu0 0.0
      %1512 = vmatpush1.msra.mxu0 0.0
      %1513 = vmatprep.mubr.f32.mxu0 0.0
      %1514 = vmatmul.mubr.f32.gmra.mrb[0].mxu0 %v1343
      %v1515 = vpop.f32.mrb[0].mxu0
      %v1516 = vadd.f32 0.0, %v1515
      %v1517 = vpop.f32.mrb[0].mxu0
      %1518 = vmatprep.mubr.f32.mxu0 0.0
      %1519 = vmatmul.mubr.f32.gmra.mrb[0].mxu0 %v1346
      %v1520 = vpop.f32.mrb[0].mxu0
      %v1521 = vadd.f32 0.0, %v1520
      %v1522 = vpop.f32.mrb[0].mxu0
      %1523 = vmatprep.mubr.f32.mxu0 0.0
      %1524 = vmatmul.mubr.f32.gmra.mrb[0].mxu0 %v1349
      %v1525 = vpop.f32.mrb[0].mxu0
      %v1526 = vadd.f32 0.0, %v1525
      %v1527 = vpop.f32.mrb[0].mxu0
      %1528 = vmatprep.mubr.f32.mxu0 0.0
      %1529 = vmatmul.mubr.f32.gmra.mrb[0].mxu0 %v1352
      %v1530 = vpop.f32.mrb[0].mxu0
      %v1531 = vadd.f32 0.0, %v1530
      %v1532 = vpop.f32.mrb[0].mxu0
      %1533 = vdwg.mxu0
      %v1534 = vadd.f32 %v1313, %v1427
      %v1535 = vadd.f32 %v1314, %v1429
      %v1536 = vadd.f32 %v1315, %v1516
      %v1537 = vadd.f32 %v1316, %v1433
      %v1538 = vadd.f32 %v1317, %v1435
      %v1539 = vadd.f32 %v1318, %v1521
      %v1540 = vadd.f32 %v1319, %v1439
      %v1541 = vadd.f32 %v1320, %v1441
      %v1542 = vadd.f32 %v1321, %v1526
      %v1543 = vadd.f32 %v1322, %v1445
      %v1544 = vadd.f32 %v1323, %v1447
      %v1545 = vadd.f32 %v1324, %v1531
      %s1546 = scalar_lea.vmem %s1, 192
      %v1547 = vld [vmem:[%s1546] sm:$0xff]
      %v1548 = vld [vmem:[%s1546 + $0x8] sm:$0xff]
      %v1549 = vld [vmem:[%s1546 + $0x10] sm:$0xff]
      %v1550 = vld [vmem:[%s1546 + $0x18] sm:$0xff]
      %1551 = vrot.lane.b32.xlu0 %v249, 92
      %v1552 = vpop.permute.xlu0 %1551
      %1553 = vrot.lane.b32.xlu0 %v262, 92
      %v1554 = vpop.permute.xlu0 %1553
      %1555 = vrot.lane.b32.xlu0 %v250, 92
      %v1556 = vpop.permute.xlu0 %1555
      %1557 = vrot.lane.b32.xlu0 %v263, 92
      %v1558 = vpop.permute.xlu0 %1557
      %vm1559 = vcmask 752640
      %v1560 = vsel %vm1559, %v1552, %v1554
      %v1561 = vsel %vm1559, %v1554, %v1556
      %v1562 = vsel %vm1559, %v1556, %v1558
      %v1564 = vsel %vm276, %v1547, 0
      %v1567 = vsel %vm276, %v1548, 0
      %v1570 = vsel %vm276, %v1549, 0
      %v1573 = vsel %vm276, %v1550, 0
      %v1575 = vsel %vm289, %v1560, 0
      %v1577 = vsel %vm289, %v1561, 0
      %v1579 = vsel %vm289, %v1562, 0
      %1581 = vmatprep.subr.mxu0 %v1577
      %1582 = vmatpush1.msra.mxu0 %v1575
      %1583 = vmatprep.subr.mxu0 0.0
      %1584 = vmatpush1.msra.mxu0 0.0
      %1585 = vmatprep.subr.mxu0 0.0
      %1586 = vmatpush1.msra.mxu0 0.0
      %1587 = vmatprep.subr.mxu0 0.0
      %1588 = vmatpush1.msra.mxu0 0.0
      %1589 = vmatprep.subr.mxu0 0.0
      %1590 = vmatpush1.msra.mxu0 0.0
      %1591 = vmatprep.subr.mxu0 0.0
      %1592 = vmatpush1.msra.mxu0 0.0
      %1593 = vmatprep.subr.mxu0 0.0
      %1594 = vmatpush1.msra.mxu0 0.0
      %1595 = vmatprep.subr.mxu0 0.0
      %1596 = vmatpush1.msra.mxu0 0.0
      %1597 = vmatprep.subr.mxu0 0.0
      %1598 = vmatpush1.msra.mxu0 0.0
      %1599 = vmatprep.subr.mxu0 0.0
      %1600 = vmatpush1.msra.mxu0 0.0
      %1601 = vmatprep.subr.mxu0 0.0
      %1602 = vmatpush1.msra.mxu0 0.0
      %1603 = vmatprep.subr.mxu0 0.0
      %1604 = vmatpush1.msra.mxu0 0.0
      %1605 = vmatprep.subr.mxu0 0.0
      %1606 = vmatpush1.msra.mxu0 0.0
      %1607 = vmatprep.subr.mxu0 0.0
      %1608 = vmatpush1.msra.mxu0 0.0
      %1609 = vmatprep.subr.mxu0 0.0
      %1610 = vmatpush1.msra.mxu0 0.0
      %1611 = vmatprep.subr.mxu0 0.0
      %1612 = vmatpush1.msra.mxu0 0.0
      %1613 = vmatprep.subr.mxu0 0.0
      %1614 = vmatpush1.msra.mxu0 0.0
      %1615 = vmatprep.subr.mxu0 0.0
      %1616 = vmatpush1.msra.mxu0 0.0
      %1617 = vmatprep.subr.mxu0 0.0
      %1618 = vmatpush1.msra.mxu0 0.0
      %1619 = vmatprep.subr.mxu0 0.0
      %1620 = vmatpush1.msra.mxu0 0.0
      %1621 = vmatprep.subr.mxu0 0.0
      %1622 = vmatpush1.msra.mxu0 0.0
      %1623 = vmatprep.subr.mxu0 0.0
      %1624 = vmatpush1.msra.mxu0 0.0
      %1625 = vmatprep.subr.mxu0 0.0
      %1626 = vmatpush1.msra.mxu0 0.0
      %1627 = vmatprep.subr.mxu0 0.0
      %1628 = vmatpush1.msra.mxu0 0.0
      %1629 = vmatprep.subr.mxu0 0.0
      %1630 = vmatpush1.msra.mxu0 0.0
      %1631 = vmatprep.subr.mxu0 0.0
      %1632 = vmatpush1.msra.mxu0 0.0
      %1633 = vmatprep.subr.mxu0 0.0
      %1634 = vmatpush1.msra.mxu0 0.0
      %1635 = vmatprep.subr.mxu0 0.0
      %1636 = vmatpush1.msra.mxu0 0.0
      %1637 = vmatprep.subr.mxu0 0.0
      %1638 = vmatpush1.msra.mxu0 0.0
      %1639 = vmatprep.subr.mxu0 0.0
      %1640 = vmatpush1.msra.mxu0 0.0
      %1641 = vmatprep.subr.mxu0 0.0
      %1642 = vmatpush1.msra.mxu0 0.0
      %1643 = vmatprep.subr.mxu0 0.0
      %1644 = vmatpush1.msra.mxu0 0.0
      %1645 = vmatprep.mubr.f32.mxu0 0.0
      %1646 = vmatmul.mubr.f32.gmra.mrb[0].mxu0 %v1564
      %v1647 = vpop.f32.mrb[0].mxu0
      %v1648 = vadd.f32 0.0, %v1647
      %v1649 = vpop.f32.mrb[0].mxu0
      %v1650 = vadd.f32 0.0, %v1649
      %1651 = vmatprep.mubr.f32.mxu0 0.0
      %1652 = vmatmul.mubr.f32.gmra.mrb[0].mxu0 %v1567
      %v1653 = vpop.f32.mrb[0].mxu0
      %v1654 = vadd.f32 0.0, %v1653
      %v1655 = vpop.f32.mrb[0].mxu0
      %v1656 = vadd.f32 0.0, %v1655
      %1657 = vmatprep.mubr.f32.mxu0 0.0
      %1658 = vmatmul.mubr.f32.gmra.mrb[0].mxu0 %v1570
      %v1659 = vpop.f32.mrb[0].mxu0
      %v1660 = vadd.f32 0.0, %v1659
      %v1661 = vpop.f32.mrb[0].mxu0
      %v1662 = vadd.f32 0.0, %v1661
      %1663 = vmatprep.mubr.f32.mxu0 0.0
      %1664 = vmatmul.mubr.f32.gmra.mrb[0].mxu0 %v1573
      %v1665 = vpop.f32.mrb[0].mxu0
      %v1666 = vadd.f32 0.0, %v1665
      %v1667 = vpop.f32.mrb[0].mxu0
      %v1668 = vadd.f32 0.0, %v1667
      %1669 = vdwg.mxu0
      %1670 = vmatprep.subr.mxu0 0.0
      %1671 = vmatpush1.msra.mxu0 %v1579
      %1672 = vmatprep.subr.mxu0 0.0
      %1673 = vmatpush1.msra.mxu0 0.0
      %1674 = vmatprep.subr.mxu0 0.0
      %1675 = vmatpush1.msra.mxu0 0.0
      %1676 = vmatprep.subr.mxu0 0.0
      %1677 = vmatpush1.msra.mxu0 0.0
      %1678 = vmatprep.subr.mxu0 0.0
      %1679 = vmatpush1.msra.mxu0 0.0
      %1680 = vmatprep.subr.mxu0 0.0
      %1681 = vmatpush1.msra.mxu0 0.0
      %1682 = vmatprep.subr.mxu0 0.0
      %1683 = vmatpush1.msra.mxu0 0.0
      %1684 = vmatprep.subr.mxu0 0.0
      %1685 = vmatpush1.msra.mxu0 0.0
      %1686 = vmatprep.subr.mxu0 0.0
      %1687 = vmatpush1.msra.mxu0 0.0
      %1688 = vmatprep.subr.mxu0 0.0
      %1689 = vmatpush1.msra.mxu0 0.0
      %1690 = vmatprep.subr.mxu0 0.0
      %1691 = vmatpush1.msra.mxu0 0.0
      %1692 = vmatprep.subr.mxu0 0.0
      %1693 = vmatpush1.msra.mxu0 0.0
      %1694 = vmatprep.subr.mxu0 0.0
      %1695 = vmatpush1.msra.mxu0 0.0
      %1696 = vmatprep.subr.mxu0 0.0
      %1697 = vmatpush1.msra.mxu0 0.0
      %1698 = vmatprep.subr.mxu0 0.0
      %1699 = vmatpush1.msra.mxu0 0.0
      %1700 = vmatprep.subr.mxu0 0.0
      %1701 = vmatpush1.msra.mxu0 0.0
      %1702 = vmatprep.subr.mxu0 0.0
      %1703 = vmatpush1.msra.mxu0 0.0
      %1704 = vmatprep.subr.mxu0 0.0
      %1705 = vmatpush1.msra.mxu0 0.0
      %1706 = vmatprep.subr.mxu0 0.0
      %1707 = vmatpush1.msra.mxu0 0.0
      %1708 = vmatprep.subr.mxu0 0.0
      %1709 = vmatpush1.msra.mxu0 0.0
      %1710 = vmatprep.subr.mxu0 0.0
      %1711 = vmatpush1.msra.mxu0 0.0
      %1712 = vmatprep.subr.mxu0 0.0
      %1713 = vmatpush1.msra.mxu0 0.0
      %1714 = vmatprep.subr.mxu0 0.0
      %1715 = vmatpush1.msra.mxu0 0.0
      %1716 = vmatprep.subr.mxu0 0.0
      %1717 = vmatpush1.msra.mxu0 0.0
      %1718 = vmatprep.subr.mxu0 0.0
      %1719 = vmatpush1.msra.mxu0 0.0
      %1720 = vmatprep.subr.mxu0 0.0
      %1721 = vmatpush1.msra.mxu0 0.0
      %1722 = vmatprep.subr.mxu0 0.0
      %1723 = vmatpush1.msra.mxu0 0.0
      %1724 = vmatprep.subr.mxu0 0.0
      %1725 = vmatpush1.msra.mxu0 0.0
      %1726 = vmatprep.subr.mxu0 0.0
      %1727 = vmatpush1.msra.mxu0 0.0
      %1728 = vmatprep.subr.mxu0 0.0
      %1729 = vmatpush1.msra.mxu0 0.0
      %1730 = vmatprep.subr.mxu0 0.0
      %1731 = vmatpush1.msra.mxu0 0.0
      %1732 = vmatprep.subr.mxu0 0.0
      %1733 = vmatpush1.msra.mxu0 0.0
      %1734 = vmatprep.mubr.f32.mxu0 0.0
      %1735 = vmatmul.mubr.f32.gmra.mrb[0].mxu0 %v1564
      %v1736 = vpop.f32.mrb[0].mxu0
      %v1737 = vadd.f32 0.0, %v1736
      %v1738 = vpop.f32.mrb[0].mxu0
      %1739 = vmatprep.mubr.f32.mxu0 0.0
      %1740 = vmatmul.mubr.f32.gmra.mrb[0].mxu0 %v1567
      %v1741 = vpop.f32.mrb[0].mxu0
      %v1742 = vadd.f32 0.0, %v1741
      %v1743 = vpop.f32.mrb[0].mxu0
      %1744 = vmatprep.mubr.f32.mxu0 0.0
      %1745 = vmatmul.mubr.f32.gmra.mrb[0].mxu0 %v1570
      %v1746 = vpop.f32.mrb[0].mxu0
      %v1747 = vadd.f32 0.0, %v1746
      %v1748 = vpop.f32.mrb[0].mxu0
      %1749 = vmatprep.mubr.f32.mxu0 0.0
      %1750 = vmatmul.mubr.f32.gmra.mrb[0].mxu0 %v1573
      %v1751 = vpop.f32.mrb[0].mxu0
      %v1752 = vadd.f32 0.0, %v1751
      %v1753 = vpop.f32.mrb[0].mxu0
      %1754 = vdwg.mxu0
      %v1755 = vadd.f32 %v1534, %v1648
      %v1756 = vadd.f32 %v1535, %v1650
      %v1757 = vadd.f32 %v1536, %v1737
      %v1758 = vadd.f32 %v1537, %v1654
      %v1759 = vadd.f32 %v1538, %v1656
      %v1760 = vadd.f32 %v1539, %v1742
      %v1761 = vadd.f32 %v1540, %v1660
      %v1762 = vadd.f32 %v1541, %v1662
      %v1763 = vadd.f32 %v1542, %v1747
      %v1764 = vadd.f32 %v1543, %v1666
      %v1765 = vadd.f32 %v1544, %v1668
      %v1766 = vadd.f32 %v1545, %v1752
      %s1767 = scalar_lea.vmem %s1, 224
      %v1768 = vld [vmem:[%s1767] sm:$0xff]
      %v1769 = vld [vmem:[%s1767 + $0x8] sm:$0xff]
      %v1770 = vld [vmem:[%s1767 + $0x10] sm:$0xff]
      %v1771 = vld [vmem:[%s1767 + $0x18] sm:$0xff]
      %1772 = vrot.lane.b32.xlu0 %v249, 91
      %v1773 = vpop.permute.xlu0 %1772
      %1774 = vrot.lane.b32.xlu0 %v262, 91
      %v1775 = vpop.permute.xlu0 %1774
      %1776 = vrot.lane.b32.xlu0 %v250, 91
      %v1777 = vpop.permute.xlu0 %1776
      %1778 = vrot.lane.b32.xlu0 %v263, 91
      %v1779 = vpop.permute.xlu0 %1778
      %vm1780 = vcmask 744448
      %v1781 = vsel %vm1780, %v1773, %v1775
      %v1782 = vsel %vm1780, %v1775, %v1777
      %v1783 = vsel %vm1780, %v1777, %v1779
      %v1785 = vsel %vm276, %v1768, 0
      %v1788 = vsel %vm276, %v1769, 0
      %v1791 = vsel %vm276, %v1770, 0
      %v1794 = vsel %vm276, %v1771, 0
      %v1796 = vsel %vm289, %v1781, 0
      %v1798 = vsel %vm289, %v1782, 0
      %v1800 = vsel %vm289, %v1783, 0
      %1802 = vmatprep.subr.mxu0 %v1798
      %1803 = vmatpush1.msra.mxu0 %v1796
      %1804 = vmatprep.subr.mxu0 0.0
      %1805 = vmatpush1.msra.mxu0 0.0
      %1806 = vmatprep.subr.mxu0 0.0
      %1807 = vmatpush1.msra.mxu0 0.0
      %1808 = vmatprep.subr.mxu0 0.0
      %1809 = vmatpush1.msra.mxu0 0.0
      %1810 = vmatprep.subr.mxu0 0.0
      %1811 = vmatpush1.msra.mxu0 0.0
      %1812 = vmatprep.subr.mxu0 0.0
      %1813 = vmatpush1.msra.mxu0 0.0
      %1814 = vmatprep.subr.mxu0 0.0
      %1815 = vmatpush1.msra.mxu0 0.0
      %1816 = vmatprep.subr.mxu0 0.0
      %1817 = vmatpush1.msra.mxu0 0.0
      %1818 = vmatprep.subr.mxu0 0.0
      %1819 = vmatpush1.msra.mxu0 0.0
      %1820 = vmatprep.subr.mxu0 0.0
      %1821 = vmatpush1.msra.mxu0 0.0
      %1822 = vmatprep.subr.mxu0 0.0
      %1823 = vmatpush1.msra.mxu0 0.0
      %1824 = vmatprep.subr.mxu0 0.0
      %1825 = vmatpush1.msra.mxu0 0.0
      %1826 = vmatprep.subr.mxu0 0.0
      %1827 = vmatpush1.msra.mxu0 0.0
      %1828 = vmatprep.subr.mxu0 0.0
      %1829 = vmatpush1.msra.mxu0 0.0
      %1830 = vmatprep.subr.mxu0 0.0
      %1831 = vmatpush1.msra.mxu0 0.0
      %1832 = vmatprep.subr.mxu0 0.0
      %1833 = vmatpush1.msra.mxu0 0.0
      %1834 = vmatprep.subr.mxu0 0.0
      %1835 = vmatpush1.msra.mxu0 0.0
      %1836 = vmatprep.subr.mxu0 0.0
      %1837 = vmatpush1.msra.mxu0 0.0
      %1838 = vmatprep.subr.mxu0 0.0
      %1839 = vmatpush1.msra.mxu0 0.0
      %1840 = vmatprep.subr.mxu0 0.0
      %1841 = vmatpush1.msra.mxu0 0.0
      %1842 = vmatprep.subr.mxu0 0.0
      %1843 = vmatpush1.msra.mxu0 0.0
      %1844 = vmatprep.subr.mxu0 0.0
      %1845 = vmatpush1.msra.mxu0 0.0
      %1846 = vmatprep.subr.mxu0 0.0
      %1847 = vmatpush1.msra.mxu0 0.0
      %1848 = vmatprep.subr.mxu0 0.0
      %1849 = vmatpush1.msra.mxu0 0.0
      %1850 = vmatprep.subr.mxu0 0.0
      %1851 = vmatpush1.msra.mxu0 0.0
      %1852 = vmatprep.subr.mxu0 0.0
      %1853 = vmatpush1.msra.mxu0 0.0
      %1854 = vmatprep.subr.mxu0 0.0
      %1855 = vmatpush1.msra.mxu0 0.0
      %1856 = vmatprep.subr.mxu0 0.0
      %1857 = vmatpush1.msra.mxu0 0.0
      %1858 = vmatprep.subr.mxu0 0.0
      %1859 = vmatpush1.msra.mxu0 0.0
      %1860 = vmatprep.subr.mxu0 0.0
      %1861 = vmatpush1.msra.mxu0 0.0
      %1862 = vmatprep.subr.mxu0 0.0
      %1863 = vmatpush1.msra.mxu0 0.0
      %1864 = vmatprep.subr.mxu0 0.0
      %1865 = vmatpush1.msra.mxu0 0.0
      %1866 = vmatprep.mubr.f32.mxu0 0.0
      %1867 = vmatmul.mubr.f32.gmra.mrb[0].mxu0 %v1785
      %v1868 = vpop.f32.mrb[0].mxu0
      %v1869 = vadd.f32 0.0, %v1868
      %v1870 = vpop.f32.mrb[0].mxu0
      %v1871 = vadd.f32 0.0, %v1870
      %1872 = vmatprep.mubr.f32.mxu0 0.0
      %1873 = vmatmul.mubr.f32.gmra.mrb[0].mxu0 %v1788
      %v1874 = vpop.f32.mrb[0].mxu0
      %v1875 = vadd.f32 0.0, %v1874
      %v1876 = vpop.f32.mrb[0].mxu0
      %v1877 = vadd.f32 0.0, %v1876
      %1878 = vmatprep.mubr.f32.mxu0 0.0
      %1879 = vmatmul.mubr.f32.gmra.mrb[0].mxu0 %v1791
      %v1880 = vpop.f32.mrb[0].mxu0
      %v1881 = vadd.f32 0.0, %v1880
      %v1882 = vpop.f32.mrb[0].mxu0
      %v1883 = vadd.f32 0.0, %v1882
      %1884 = vmatprep.mubr.f32.mxu0 0.0
      %1885 = vmatmul.mubr.f32.gmra.mrb[0].mxu0 %v1794
      %v1886 = vpop.f32.mrb[0].mxu0
      %v1887 = vadd.f32 0.0, %v1886
      %v1888 = vpop.f32.mrb[0].mxu0
      %v1889 = vadd.f32 0.0, %v1888
      %1890 = vdwg.mxu0
      %1891 = vmatprep.subr.mxu0 0.0
      %1892 = vmatpush1.msra.mxu0 %v1800
      %1893 = vmatprep.subr.mxu0 0.0
      %1894 = vmatpush1.msra.mxu0 0.0
      %1895 = vmatprep.subr.mxu0 0.0
      %1896 = vmatpush1.msra.mxu0 0.0
      %1897 = vmatprep.subr.mxu0 0.0
      %1898 = vmatpush1.msra.mxu0 0.0
      %1899 = vmatprep.subr.mxu0 0.0
      %1900 = vmatpush1.msra.mxu0 0.0
      %1901 = vmatprep.subr.mxu0 0.0
      %1902 = vmatpush1.msra.mxu0 0.0
      %1903 = vmatprep.subr.mxu0 0.0
      %1904 = vmatpush1.msra.mxu0 0.0
      %1905 = vmatprep.subr.mxu0 0.0
      %1906 = vmatpush1.msra.mxu0 0.0
      %1907 = vmatprep.subr.mxu0 0.0
      %1908 = vmatpush1.msra.mxu0 0.0
      %1909 = vmatprep.subr.mxu0 0.0
      %1910 = vmatpush1.msra.mxu0 0.0
      %1911 = vmatprep.subr.mxu0 0.0
      %1912 = vmatpush1.msra.mxu0 0.0
      %1913 = vmatprep.subr.mxu0 0.0
      %1914 = vmatpush1.msra.mxu0 0.0
      %1915 = vmatprep.subr.mxu0 0.0
      %1916 = vmatpush1.msra.mxu0 0.0
      %1917 = vmatprep.subr.mxu0 0.0
      %1918 = vmatpush1.msra.mxu0 0.0
      %1919 = vmatprep.subr.mxu0 0.0
      %1920 = vmatpush1.msra.mxu0 0.0
      %1921 = vmatprep.subr.mxu0 0.0
      %1922 = vmatpush1.msra.mxu0 0.0
      %1923 = vmatprep.subr.mxu0 0.0
      %1924 = vmatpush1.msra.mxu0 0.0
      %1925 = vmatprep.subr.mxu0 0.0
      %1926 = vmatpush1.msra.mxu0 0.0
      %1927 = vmatprep.subr.mxu0 0.0
      %1928 = vmatpush1.msra.mxu0 0.0
      %1929 = vmatprep.subr.mxu0 0.0
      %1930 = vmatpush1.msra.mxu0 0.0
      %1931 = vmatprep.subr.mxu0 0.0
      %1932 = vmatpush1.msra.mxu0 0.0
      %1933 = vmatprep.subr.mxu0 0.0
      %1934 = vmatpush1.msra.mxu0 0.0
      %1935 = vmatprep.subr.mxu0 0.0
      %1936 = vmatpush1.msra.mxu0 0.0
      %1937 = vmatprep.subr.mxu0 0.0
      %1938 = vmatpush1.msra.mxu0 0.0
      %1939 = vmatprep.subr.mxu0 0.0
      %1940 = vmatpush1.msra.mxu0 0.0
      %1941 = vmatprep.subr.mxu0 0.0
      %1942 = vmatpush1.msra.mxu0 0.0
      %1943 = vmatprep.subr.mxu0 0.0
      %1944 = vmatpush1.msra.mxu0 0.0
      %1945 = vmatprep.subr.mxu0 0.0
      %1946 = vmatpush1.msra.mxu0 0.0
      %1947 = vmatprep.subr.mxu0 0.0
      %1948 = vmatpush1.msra.mxu0 0.0
      %1949 = vmatprep.subr.mxu0 0.0
      %1950 = vmatpush1.msra.mxu0 0.0
      %1951 = vmatprep.subr.mxu0 0.0
      %1952 = vmatpush1.msra.mxu0 0.0
      %1953 = vmatprep.subr.mxu0 0.0
      %1954 = vmatpush1.msra.mxu0 0.0
      %1955 = vmatprep.mubr.f32.mxu0 0.0
      %1956 = vmatmul.mubr.f32.gmra.mrb[0].mxu0 %v1785
      %v1957 = vpop.f32.mrb[0].mxu0
      %v1958 = vadd.f32 0.0, %v1957
      %v1959 = vpop.f32.mrb[0].mxu0
      %1960 = vmatprep.mubr.f32.mxu0 0.0
      %1961 = vmatmul.mubr.f32.gmra.mrb[0].mxu0 %v1788
      %v1962 = vpop.f32.mrb[0].mxu0
      %v1963 = vadd.f32 0.0, %v1962
      %v1964 = vpop.f32.mrb[0].mxu0
      %1965 = vmatprep.mubr.f32.mxu0 0.0
      %1966 = vmatmul.mubr.f32.gmra.mrb[0].mxu0 %v1791
      %v1967 = vpop.f32.mrb[0].mxu0
      %v1968 = vadd.f32 0.0, %v1967
      %v1969 = vpop.f32.mrb[0].mxu0
      %1970 = vmatprep.mubr.f32.mxu0 0.0
      %1971 = vmatmul.mubr.f32.gmra.mrb[0].mxu0 %v1794
      %v1972 = vpop.f32.mrb[0].mxu0
      %v1973 = vadd.f32 0.0, %v1972
      %v1974 = vpop.f32.mrb[0].mxu0
      %1975 = vdwg.mxu0
      %v1976 = vadd.f32 %v1755, %v1869
      %v1977 = vadd.f32 %v1756, %v1871
      %v1978 = vadd.f32 %v1757, %v1958
      %v1979 = vadd.f32 %v1758, %v1875
      %v1980 = vadd.f32 %v1759, %v1877
      %v1981 = vadd.f32 %v1760, %v1963
      %v1982 = vadd.f32 %v1761, %v1881
      %v1983 = vadd.f32 %v1762, %v1883
      %v1984 = vadd.f32 %v1763, %v1968
      %v1985 = vadd.f32 %v1764, %v1887
      %v1986 = vadd.f32 %v1765, %v1889
      %v1987 = vadd.f32 %v1766, %v1973
      %s1988 = scalar_lea.vmem %s1, 256
      %v1989 = vld [vmem:[%s1988] sm:$0xff]
      %v1990 = vld [vmem:[%s1988 + $0x8] sm:$0xff]
      %v1991 = vld [vmem:[%s1988 + $0x10] sm:$0xff]
      %v1992 = vld [vmem:[%s1988 + $0x18] sm:$0xff]
      %1993 = vrot.lane.b32.xlu0 %v249, 90
      %v1994 = vpop.permute.xlu0 %1993
      %1995 = vrot.lane.b32.xlu0 %v262, 90
      %v1996 = vpop.permute.xlu0 %1995
      %1997 = vrot.lane.b32.xlu0 %v250, 90
      %v1998 = vpop.permute.xlu0 %1997
      %1999 = vrot.lane.b32.xlu0 %v263, 90
      %v2000 = vpop.permute.xlu0 %1999
      %vm2001 = vcmask 736256
      %v2002 = vsel %vm2001, %v1994, %v1996
      %v2003 = vsel %vm2001, %v1996, %v1998
      %v2004 = vsel %vm2001, %v1998, %v2000
      %v2006 = vsel %vm276, %v1989, 0
      %v2009 = vsel %vm276, %v1990, 0
      %v2012 = vsel %vm276, %v1991, 0
      %v2015 = vsel %vm276, %v1992, 0
      %v2017 = vsel %vm289, %v2002, 0
      %v2019 = vsel %vm289, %v2003, 0
      %v2021 = vsel %vm289, %v2004, 0
      %2023 = vmatprep.subr.mxu0 %v2019
      %2024 = vmatpush1.msra.mxu0 %v2017
      %2025 = vmatprep.subr.mxu0 0.0
      %2026 = vmatpush1.msra.mxu0 0.0
      %2027 = vmatprep.subr.mxu0 0.0
      %2028 = vmatpush1.msra.mxu0 0.0
      %2029 = vmatprep.subr.mxu0 0.0
      %2030 = vmatpush1.msra.mxu0 0.0
      %2031 = vmatprep.subr.mxu0 0.0
      %2032 = vmatpush1.msra.mxu0 0.0
      %2033 = vmatprep.subr.mxu0 0.0
      %2034 = vmatpush1.msra.mxu0 0.0
      %2035 = vmatprep.subr.mxu0 0.0
      %2036 = vmatpush1.msra.mxu0 0.0
      %2037 = vmatprep.subr.mxu0 0.0
      %2038 = vmatpush1.msra.mxu0 0.0
      %2039 = vmatprep.subr.mxu0 0.0
      %2040 = vmatpush1.msra.mxu0 0.0
      %2041 = vmatprep.subr.mxu0 0.0
      %2042 = vmatpush1.msra.mxu0 0.0
      %2043 = vmatprep.subr.mxu0 0.0
      %2044 = vmatpush1.msra.mxu0 0.0
      %2045 = vmatprep.subr.mxu0 0.0
      %2046 = vmatpush1.msra.mxu0 0.0
      %2047 = vmatprep.subr.mxu0 0.0
      %2048 = vmatpush1.msra.mxu0 0.0
      %2049 = vmatprep.subr.mxu0 0.0
      %2050 = vmatpush1.msra.mxu0 0.0
      %2051 = vmatprep.subr.mxu0 0.0
      %2052 = vmatpush1.msra.mxu0 0.0
      %2053 = vmatprep.subr.mxu0 0.0
      %2054 = vmatpush1.msra.mxu0 0.0
      %2055 = vmatprep.subr.mxu0 0.0
      %2056 = vmatpush1.msra.mxu0 0.0
      %2057 = vmatprep.subr.mxu0 0.0
      %2058 = vmatpush1.msra.mxu0 0.0
      %2059 = vmatprep.subr.mxu0 0.0
      %2060 = vmatpush1.msra.mxu0 0.0
      %2061 = vmatprep.subr.mxu0 0.0
      %2062 = vmatpush1.msra.mxu0 0.0
      %2063 = vmatprep.subr.mxu0 0.0
      %2064 = vmatpush1.msra.mxu0 0.0
      %2065 = vmatprep.subr.mxu0 0.0
      %2066 = vmatpush1.msra.mxu0 0.0
      %2067 = vmatprep.subr.mxu0 0.0
      %2068 = vmatpush1.msra.mxu0 0.0
      %2069 = vmatprep.subr.mxu0 0.0
      %2070 = vmatpush1.msra.mxu0 0.0
      %2071 = vmatprep.subr.mxu0 0.0
      %2072 = vmatpush1.msra.mxu0 0.0
      %2073 = vmatprep.subr.mxu0 0.0
      %2074 = vmatpush1.msra.mxu0 0.0
      %2075 = vmatprep.subr.mxu0 0.0
      %2076 = vmatpush1.msra.mxu0 0.0
      %2077 = vmatprep.subr.mxu0 0.0
      %2078 = vmatpush1.msra.mxu0 0.0
      %2079 = vmatprep.subr.mxu0 0.0
      %2080 = vmatpush1.msra.mxu0 0.0
      %2081 = vmatprep.subr.mxu0 0.0
      %2082 = vmatpush1.msra.mxu0 0.0
      %2083 = vmatprep.subr.mxu0 0.0
      %2084 = vmatpush1.msra.mxu0 0.0
      %2085 = vmatprep.subr.mxu0 0.0
      %2086 = vmatpush1.msra.mxu0 0.0
      %2087 = vmatprep.mubr.f32.mxu0 0.0
      %2088 = vmatmul.mubr.f32.gmra.mrb[0].mxu0 %v2006
      %v2089 = vpop.f32.mrb[0].mxu0
      %v2090 = vadd.f32 0.0, %v2089
      %v2091 = vpop.f32.mrb[0].mxu0
      %v2092 = vadd.f32 0.0, %v2091
      %2093 = vmatprep.mubr.f32.mxu0 0.0
      %2094 = vmatmul.mubr.f32.gmra.mrb[0].mxu0 %v2009
      %v2095 = vpop.f32.mrb[0].mxu0
      %v2096 = vadd.f32 0.0, %v2095
      %v2097 = vpop.f32.mrb[0].mxu0
      %v2098 = vadd.f32 0.0, %v2097
      %2099 = vmatprep.mubr.f32.mxu0 0.0
      %2100 = vmatmul.mubr.f32.gmra.mrb[0].mxu0 %v2012
      %v2101 = vpop.f32.mrb[0].mxu0
      %v2102 = vadd.f32 0.0, %v2101
      %v2103 = vpop.f32.mrb[0].mxu0
      %v2104 = vadd.f32 0.0, %v2103
      %2105 = vmatprep.mubr.f32.mxu0 0.0
      %2106 = vmatmul.mubr.f32.gmra.mrb[0].mxu0 %v2015
      %v2107 = vpop.f32.mrb[0].mxu0
      %v2108 = vadd.f32 0.0, %v2107
      %v2109 = vpop.f32.mrb[0].mxu0
      %v2110 = vadd.f32 0.0, %v2109
      %2111 = vdwg.mxu0
      %2112 = vmatprep.subr.mxu0 0.0
      %2113 = vmatpush1.msra.mxu0 %v2021
      %2114 = vmatprep.subr.mxu0 0.0
      %2115 = vmatpush1.msra.mxu0 0.0
      %2116 = vmatprep.subr.mxu0 0.0
      %2117 = vmatpush1.msra.mxu0 0.0
      %2118 = vmatprep.subr.mxu0 0.0
      %2119 = vmatpush1.msra.mxu0 0.0
      %2120 = vmatprep.subr.mxu0 0.0
      %2121 = vmatpush1.msra.mxu0 0.0
      %2122 = vmatprep.subr.mxu0 0.0
      %2123 = vmatpush1.msra.mxu0 0.0
      %2124 = vmatprep.subr.mxu0 0.0
      %2125 = vmatpush1.msra.mxu0 0.0
      %2126 = vmatprep.subr.mxu0 0.0
      %2127 = vmatpush1.msra.mxu0 0.0
      %2128 = vmatprep.subr.mxu0 0.0
      %2129 = vmatpush1.msra.mxu0 0.0
      %2130 = vmatprep.subr.mxu0 0.0
      %2131 = vmatpush1.msra.mxu0 0.0
      %2132 = vmatprep.subr.mxu0 0.0
      %2133 = vmatpush1.msra.mxu0 0.0
      %2134 = vmatprep.subr.mxu0 0.0
      %2135 = vmatpush1.msra.mxu0 0.0
      %2136 = vmatprep.subr.mxu0 0.0
      %2137 = vmatpush1.msra.mxu0 0.0
      %2138 = vmatprep.subr.mxu0 0.0
      %2139 = vmatpush1.msra.mxu0 0.0
      %2140 = vmatprep.subr.mxu0 0.0
      %2141 = vmatpush1.msra.mxu0 0.0
      %2142 = vmatprep.subr.mxu0 0.0
      %2143 = vmatpush1.msra.mxu0 0.0
      %2144 = vmatprep.subr.mxu0 0.0
      %2145 = vmatpush1.msra.mxu0 0.0
      %2146 = vmatprep.subr.mxu0 0.0
      %2147 = vmatpush1.msra.mxu0 0.0
      %2148 = vmatprep.subr.mxu0 0.0
      %2149 = vmatpush1.msra.mxu0 0.0
      %2150 = vmatprep.subr.mxu0 0.0
      %2151 = vmatpush1.msra.mxu0 0.0
      %2152 = vmatprep.subr.mxu0 0.0
      %2153 = vmatpush1.msra.mxu0 0.0
      %2154 = vmatprep.subr.mxu0 0.0
      %2155 = vmatpush1.msra.mxu0 0.0
      %2156 = vmatprep.subr.mxu0 0.0
      %2157 = vmatpush1.msra.mxu0 0.0
      %2158 = vmatprep.subr.mxu0 0.0
      %2159 = vmatpush1.msra.mxu0 0.0
      %2160 = vmatprep.subr.mxu0 0.0
      %2161 = vmatpush1.msra.mxu0 0.0
      %2162 = vmatprep.subr.mxu0 0.0
      %2163 = vmatpush1.msra.mxu0 0.0
      %2164 = vmatprep.subr.mxu0 0.0
      %2165 = vmatpush1.msra.mxu0 0.0
      %2166 = vmatprep.subr.mxu0 0.0
      %2167 = vmatpush1.msra.mxu0 0.0
      %2168 = vmatprep.subr.mxu0 0.0
      %2169 = vmatpush1.msra.mxu0 0.0
      %2170 = vmatprep.subr.mxu0 0.0
      %2171 = vmatpush1.msra.mxu0 0.0
      %2172 = vmatprep.subr.mxu0 0.0
      %2173 = vmatpush1.msra.mxu0 0.0
      %2174 = vmatprep.subr.mxu0 0.0
      %2175 = vmatpush1.msra.mxu0 0.0
      %2176 = vmatprep.mubr.f32.mxu0 0.0
      %2177 = vmatmul.mubr.f32.gmra.mrb[0].mxu0 %v2006
      %v2178 = vpop.f32.mrb[0].mxu0
      %v2179 = vadd.f32 0.0, %v2178
      %v2180 = vpop.f32.mrb[0].mxu0
      %2181 = vmatprep.mubr.f32.mxu0 0.0
      %2182 = vmatmul.mubr.f32.gmra.mrb[0].mxu0 %v2009
      %v2183 = vpop.f32.mrb[0].mxu0
      %v2184 = vadd.f32 0.0, %v2183
      %v2185 = vpop.f32.mrb[0].mxu0
      %2186 = vmatprep.mubr.f32.mxu0 0.0
      %2187 = vmatmul.mubr.f32.gmra.mrb[0].mxu0 %v2012
      %v2188 = vpop.f32.mrb[0].mxu0
      %v2189 = vadd.f32 0.0, %v2188
      %v2190 = vpop.f32.mrb[0].mxu0
      %2191 = vmatprep.mubr.f32.mxu0 0.0
      %2192 = vmatmul.mubr.f32.gmra.mrb[0].mxu0 %v2015
      %v2193 = vpop.f32.mrb[0].mxu0
      %v2194 = vadd.f32 0.0, %v2193
      %v2195 = vpop.f32.mrb[0].mxu0
      %2196 = vdwg.mxu0
      %v2197 = vadd.f32 %v1976, %v2090
      %v2198 = vadd.f32 %v1977, %v2092
      %v2199 = vadd.f32 %v1978, %v2179
      %v2200 = vadd.f32 %v1979, %v2096
      %v2201 = vadd.f32 %v1980, %v2098
      %v2202 = vadd.f32 %v1981, %v2184
      %v2203 = vadd.f32 %v1982, %v2102
      %v2204 = vadd.f32 %v1983, %v2104
      %v2205 = vadd.f32 %v1984, %v2189
      %v2206 = vadd.f32 %v1985, %v2108
      %v2207 = vadd.f32 %v1986, %v2110
      %v2208 = vadd.f32 %v1987, %v2194
      %v2209 = vld [vmem:[%s2] sm:$0xff]
      %v2210 = vld [vmem:[%s2 + $0x8] sm:$0xff]
      %v2211 = vld [vmem:[%s2 + $0x10] sm:$0xff]
      %v2212 = vld [vmem:[%s2 + $0x18] sm:$0xff]
      %2214 = vset.pattern.permute.xlu0 0
      %2215 = vperm.xlu0 %2214, %v2209
      %v2216 = vpop.permute.xlu0 %2215
      %2219 = vset.pattern.permute.xlu0 0
      %2220 = vperm.xlu0 %2219, %v2210
      %v2221 = vpop.permute.xlu0 %2220
      %2224 = vset.pattern.permute.xlu0 0
      %2225 = vperm.xlu0 %2224, %v2211
      %v2226 = vpop.permute.xlu0 %2225
      %2229 = vset.pattern.permute.xlu0 0
      %2230 = vperm.xlu0 %2229, %v2212
      %v2231 = vpop.permute.xlu0 %2230
      %v2233 = vadd.f32 %v2197, %v2216
      %v2234 = vadd.f32 %v2198, %v2216
      %v2235 = vadd.f32 %v2199, %v2216
      %v2236 = vadd.f32 %v2200, %v2221
      %v2237 = vadd.f32 %v2201, %v2221
      %v2238 = vadd.f32 %v2202, %v2221
      %v2239 = vadd.f32 %v2203, %v2226
      %v2240 = vadd.f32 %v2204, %v2226
      %v2241 = vadd.f32 %v2205, %v2226
      %v2242 = vadd.f32 %v2206, %v2231
      %v2243 = vadd.f32 %v2207, %v2231
      %v2244 = vadd.f32 %v2208, %v2231
      %v2245 = vmax.f32 %v2233, 0.0
      %v2246 = vmax.f32 %v2234, 0.0
      %v2247 = vmax.f32 %v2235, 0.0
      %v2248 = vmax.f32 %v2236, 0.0
      %v2249 = vmax.f32 %v2237, 0.0
      %v2250 = vmax.f32 %v2238, 0.0
      %v2251 = vmax.f32 %v2239, 0.0
      %v2252 = vmax.f32 %v2240, 0.0
      %v2253 = vmax.f32 %v2241, 0.0
      %v2254 = vmax.f32 %v2242, 0.0
      %v2255 = vmax.f32 %v2243, 0.0
      %v2256 = vmax.f32 %v2244, 0.0
      %v2257 = vld [vmem:[%s4] sm:$0x7]
      %v2259 = vlaneseq
      %v2260 = vshrl.u32 %v2259, 7
      %v2261 = vsub.s32 0, %v2260
      %v2262 = vrot.slane %v2257, %v2261
      %v2263 = vlaneseq
      %v2264 = vshrl.u32 %v2263, 7
      %v2265 = vsub.s32 1, %v2264
      %v2266 = vrot.slane %v2257, %v2265
      %v2267 = vlaneseq
      %v2268 = vshrl.u32 %v2267, 7
      %v2269 = vsub.s32 2, %v2268
      %v2270 = vrot.slane %v2257, %v2269
      %v2274 = vmul.f32 %v2245, %v2262
      %v2275 = vmul.f32 %v2246, %v2266
      %v2276 = vmul.f32 %v2247, %v2270
      %v2277 = vmul.f32 %v2248, %v2262
      %v2278 = vmul.f32 %v2249, %v2266
      %v2279 = vmul.f32 %v2250, %v2270
      %v2280 = vmul.f32 %v2251, %v2262
      %v2281 = vmul.f32 %v2252, %v2266
      %v2282 = vmul.f32 %v2253, %v2270
      %v2283 = vmul.f32 %v2254, %v2262
      %v2284 = vmul.f32 %v2255, %v2266
      %v2285 = vmul.f32 %v2256, %v2270
      %v2286 = vadd.f32 %v2274, %v2275
      %v2287 = vadd.f32 %v2286, %v2276
      %2288 = vadd.xlane.f32.xlu0 %v2287
      %v2289 = vpop.xlane.xlu0 %2288
      %v2290 = vadd.f32 %v2277, %v2278
      %v2291 = vadd.f32 %v2290, %v2279
      %2292 = vadd.xlane.f32.xlu0 %v2291
      %v2293 = vpop.xlane.xlu0 %2292
      %v2294 = vadd.f32 %v2280, %v2281
      %v2295 = vadd.f32 %v2294, %v2282
      %2296 = vadd.xlane.f32.xlu0 %v2295
      %v2297 = vpop.xlane.xlu0 %2296
      %v2298 = vadd.f32 %v2283, %v2284
      %v2299 = vadd.f32 %v2298, %v2285
      %2300 = vadd.xlane.f32.xlu0 %v2299
      %v2301 = vpop.xlane.xlu0 %2300
      %v2302 = vld [vmem:[%s3] sm:$0xff]
      %v2303 = vld [vmem:[%s3 + $0x8] sm:$0xff]
      %v2304 = vld [vmem:[%s3 + $0x10] sm:$0xff]
      %v2305 = vld [vmem:[%s3 + $0x18] sm:$0xff]
      %v2306 = vmul.f32 %v2289, %v2302
      %v2307 = vmul.f32 %v2293, %v2303
      %v2308 = vmul.f32 %v2297, %v2304
      %v2309 = vmul.f32 %v2301, %v2305
      %vm2310 = vcmask 7168
      %v2311 = vsel %vm2310, %v2306, 0.0
      %v2312 = vsel %vm2310, %v2307, 0.0
      %v2313 = vadd.f32 %v2311, %v2312
      %v2314 = vsel %vm2310, %v2308, 0.0
      %v2315 = vadd.f32 %v2313, %v2314
      %v2316 = vsel %vm2310, %v2309, 0.0
      %v2317 = vadd.f32 %v2315, %v2316
      %v2318 = vrot.slane %v2317, 4
      %v2319 = vadd.f32 %v2317, %v2318
      %v2320 = vrot.slane %v2319, 2
      %v2321 = vadd.f32 %v2319, %v2320
      %v2322 = vrot.slane %v2321, 1
      %v2323 = vadd.f32 %v2321, %v2322
      %s2324 = sld [smem:[#allocation2]]
      %v2325 = vstv %s2324
      %v2326 = vadd.f32 %v2323, %v2325
      %2328 = vset.pattern.permute.xlu0 0
      %2329 = vperm.xlu0 %2328, %v2326
      %v2330 = vpop.permute.xlu0 %2329
      %2332 = vst [vmem:[%s248] sm:$0x1] %v2330
      %p2333 = scmp.lt.s32.totalorder %s18, 1
      %s2334 = scalar_select %p2333, %s18, 1
      %s2335 = scalar_lea.vmem %s6, %s2334
      // Predicated region
      $region45: #{simple_regressor_forward.1} parent=43 // pred_check
        %p2336 = pneg %p167
      $region46: #{simple_regressor_forward.1} parent=43 // pred_check_branch
        %2338 = sbr.rel (%p2336) target = $region48
      $region47: #{simple_regressor_forward.1} parent=43 // pred_region
        _
      $region48: #{simple_regressor_forward.1} parent=43 // pred_fallthru
        _
    $region44: #{simple_regressor_forward.1} parent=5 // pred_fallthru
      _
    %p2339 = scmp.le.s32.totalorder 2, %s13
    // Predicated region
    $region49: #{simple_regressor_forward.1} parent=5 // pred_check
      %p2340 = pneg %p2339
    $region50: #{simple_regressor_forward.1} parent=5 // pred_check_branch
      %2342 = sbr.rel (%p2340) target = $region52
    $region51: #{simple_regressor_forward.1} parent=5 // pred_region
      %s2343 = ssub.s32 %s13, 2
      // Predicated region
      $region53: #{simple_regressor_forward.1} parent=51 // pred_check
        %p2344 = pneg %p173
      $region54: #{simple_regressor_forward.1} parent=51 // pred_check_branch
        %2346 = sbr.rel (%p2344) target = $region56
      $region55: #{simple_regressor_forward.1} parent=51 // pred_region
        %p2347 = scmp.lt.s32.totalorder %s19, 1
        %s2348 = scalar_select %p2347, %s19, 1
        %s2349 = scalar_lea.vmem %s6, %s2348
      $region56: #{simple_regressor_forward.1} parent=51 // pred_fallthru
        _
    $region52: #{simple_regressor_forward.1} parent=5 // pred_fallthru
      _
  $region6: #{simple_regressor_forward.1} parent=0 // loop_footer
    %s17 = sadd.s32 1, %s13
  $region7: #{simple_regressor_forward.1} parent=0 // loop_footer_branch
    %12 = sbr.rel target = $region3
  $region8: #{simple_regressor_forward.1} parent=0 // loop_exit
    _

</llo_original>
